<compile_context>
chip_gen: v7x
topology: tpu7x:2x2x1
jax: 0.10.0
libtpu: 0.0.40
codegen_flags: <defaults>
</compile_context>

<pallas_src>
import functools

import jax
import jax.numpy as jnp
import numpy as np
from jax.experimental import pallas as pl
from jax.experimental.pallas import tpu as pltpu


# ---------------------------------------------------------------------------
# Kernel
# ---------------------------------------------------------------------------
def _segnet_kernel(*refs, H, W, relu_after):
    """Fused SimpleSegNet forward for ONE batch element.

    refs = (x_ref, masks_ref, w0, b0, w1, b1, ..., o_ref)
      x_ref     : (1, Cin, H*W)       NCHW input, spatial dims collapsed
      masks_ref : (9, H*W)            0/1 border-validity mask per 3x3 tap
      w_l       : (Cout_l, 9*Cin_l)   im2col-ordered conv weights
      b_l       : (Cout_l, 1)         bias
      o_ref     : (1, num_classes, H*W)
    """
    x_ref, masks_ref, o_ref = refs[0], refs[1], refs[-1]
    wb_refs = refs[2:-1]
    num_layers = len(wb_refs) // 2

    masks = masks_ref[...]                                  # (9, HW) f32 in {0,1}

    def conv3x3(x_cf, w_ref, b_ref):
        # x_cf: (Cin, HW) f32, channels-first, H*W on the lane axis.
        pieces = []
        for kh in range(3):
            for kw in range(3):
                t = kh * 3 + kw
                off = (kh - 1) * W + (kw - 1)               # static shift per tap
                if off == 0:
                    pieces.append(x_cf)                     # centre tap: all valid
                else:
                    shifted = jnp.roll(x_cf, -off, axis=1)  # XLU lane rotation
                    pieces.append(shifted * masks[t:t + 1, :])
        col = jnp.concatenate(pieces, axis=0)               # (9*Cin, HW) im2col
        y = jnp.dot(w_ref[...], col,                        # single MXU matmul
                    preferred_element_type=jnp.float32)     # (Cout, HW)
        return y + b_ref[...]                               # bias: lane broadcast

    h = x_ref[0].astype(jnp.float32)                        # (Cin, HW)
    for layer in range(num_layers):
        h = conv3x3(h, wb_refs[2 * layer], wb_refs[2 * layer + 1])
        if layer in relu_after:
            h = jnp.maximum(h, 0.0)                         # fused ReLU

    nc = o_ref.shape[1]                                     # true num_classes
    # Fused sigmoid (EUP) + lane-dense store (last dim = H*W = 2*128 lanes).
    o_ref[0] = jax.nn.sigmoid(h[:nc]).astype(o_ref.dtype)


# ---------------------------------------------------------------------------
# Wrapper
# ---------------------------------------------------------------------------
def _tap_masks(H, W):
    """(9, H*W) float32 0/1 masks: 1 where the 3x3 tap's source pixel is in-bounds."""
    hh, ww = np.meshgrid(np.arange(H), np.arange(W), indexing="ij")
    rows = []
    for kh in range(3):
        for kw in range(3):
            dh, dw = kh - 1, kw - 1
            ok = (hh + dh >= 0) & (hh + dh < H) & (ww + dw >= 0) & (ww + dw < W)
            rows.append(ok.reshape(-1))
    return np.stack(rows).astype(np.float32)


def torch_oihw_to_hwio(w_oihw):
    """PyTorch Conv2d weight (O, I, kH, kW) -> HWIO, for loading real checkpoints."""
    return jnp.transpose(w_oihw, (2, 3, 1, 0))


@jax.jit
def simple_seg_net_forward(x_nchw, params):
    """Forward pass matching SimpleSegNet.forward: NCHW in -> sigmoid(NCHW) out."""
    N, Cin, H, W = x_nchw.shape
    HW = H * W
    num_classes = params[-1][0].shape[-1]

    # Free row-major collapse of the spatial dims; no transpose, no pad.
    x_flat = x_nchw.reshape(N, Cin, HW).astype(jnp.float32)
    masks = jnp.asarray(_tap_masks(H, W))                   # (9, HW) constant

    in_specs = [
        pl.BlockSpec((1, Cin, HW), lambda n: (n, 0, 0)),    # per-batch input tile
        pl.BlockSpec((9, HW), lambda n: (0, 0)),            # tap masks (resident)
    ]
    flat_wb = []
    for li, (w_hwio, b) in enumerate(params):
        ci, co = w_hwio.shape[2], w_hwio.shape[3]
        # HWIO (3,3,ci,co) -> (co, 9*ci): row-major reshape keeps the
        # (tap-major, channel-minor) ordering used to build im2col in-kernel.
        w2d = w_hwio.reshape(9 * ci, co).T.astype(jnp.float32)
        b2d = b.reshape(co, 1).astype(jnp.float32)
        if li == len(params) - 1 and co < 8:
            # Pad the final layer's output channels to a full sublane group so
            # the last MXU matmul has M >= 8; the kernel slices back pre-store.
            pad = 8 - co
            w2d = jnp.concatenate([w2d, jnp.zeros((pad, 9 * ci), jnp.float32)], 0)
            b2d = jnp.concatenate([b2d, jnp.zeros((pad, 1), jnp.float32)], 0)
            co = 8
        flat_wb += [w2d, b2d]
        in_specs += [pl.BlockSpec((co, 9 * ci), lambda n: (0, 0)),
                     pl.BlockSpec((co, 1), lambda n: (0, 0))]

    flops = 2 * N * HW * 9 * sum(w.shape[2] * w.shape[3] for (w, _) in params)
    bytes_accessed = 4 * (x_flat.size + N * num_classes * HW + masks.size
                          + sum(p.size for p in flat_wb))
    cost = pl.CostEstimate(flops=int(flops),
                           transcendentals=int(N * HW * num_classes),
                           bytes_accessed=int(bytes_accessed))

    kernel = functools.partial(_segnet_kernel, H=H, W=W, relu_after=(1,))

    out = pl.pallas_call(
        kernel,
        out_shape=jax.ShapeDtypeStruct((N, num_classes, HW), jnp.float32),
        grid_spec=pltpu.PrefetchScalarGridSpec(
            num_scalar_prefetch=0,
            grid=(N,),                                      # >=2 parallel steps
            in_specs=in_specs,                              # keeps both v7x TCs busy
            out_specs=pl.BlockSpec((1, num_classes, HW), lambda n: (n, 0, 0)),
        ),
        compiler_params=pltpu.CompilerParams(
            dimension_semantics=("parallel",)),
        cost_estimate=cost,
    )(x_flat, masks, *flat_wb)

    return out.reshape(N, num_classes, H, W)                # already NCHW


# ---------------------------------------------------------------------------
# Params + reference
# ---------------------------------------------------------------------------
def init_params(key, in_channels, num_classes=1):
    """Deterministic synthetic params; conv weights stored HWIO (3,3,Cin,Cout)."""
    c = in_channels
    dims = [(c, 2 * c), (2 * c, 4 * c), (4 * c, 2 * c), (2 * c, num_classes)]
    params = []
    for i, (ci, co) in enumerate(dims):
        kw_, kb_ = jax.random.split(jax.random.fold_in(key, i))
        s = 1.0 / jnp.sqrt(ci * 9.0)        # ~ PyTorch default Conv2d init scale
        w = jax.random.uniform(kw_, (3, 3, ci, co), jnp.float32, -s, s)
        b = jax.random.uniform(kb_, (co,), jnp.float32, -s, s)
        params.append((w, b))
    return params


def _reference_forward(x_nchw, params):
    """Pure-XLA reference (lax.conv) used only for the correctness check."""
    y = x_nchw
    for i, (w_hwio, b) in enumerate(params):
        y = jax.lax.conv_general_dilated(
            y, w_hwio, window_strides=(1, 1), padding=((1, 1), (1, 1)),
            dimension_numbers=("NCHW", "HWIO", "NCHW"),
            precision=jax.lax.Precision.HIGHEST)
        y = y + b.reshape(1, -1, 1, 1)
        if i == 1:
            y = jax.nn.relu(y)
    return jax.nn.sigmoid(y)


if __name__ == "__main__":
    key = jax.random.PRNGKey(0)
    batch, in_channels, H, W = 2, 4, 16, 16
    num_classes = 1

    k_x, k_p = jax.random.split(key)
    x = jax.random.normal(k_x, (batch, in_channels, H, W), jnp.float32)
    params = init_params(k_p, in_channels, num_classes)

    out = simple_seg_net_forward(x, params)
    out = jax.block_until_ready(out)

    assert out.shape == (batch, num_classes, H, W), out.shape
    assert bool(jnp.all(jnp.isfinite(out)))
    assert bool(jnp.all((out >= 0.0) & (out <= 1.0)))       # sigmoid range

    ref = _reference_forward(x, params)
    max_err = float(jnp.max(jnp.abs(out - ref)))
    assert max_err < 5e-3, f"mismatch vs lax.conv reference: {max_err}"
    print("KERNEL_OK")
</pallas_src>

<mosaic_0001>
module attributes {stable_mosaic.version = 11 : i64} {
  func.func @_segnet_kernel(%arg0: i32, %arg1: memref<1x4x256xf32, #tpu.memory_space<vmem>>, %arg2: memref<9x256xf32, #tpu.memory_space<vmem>>, %arg3: memref<8x36xf32, #tpu.memory_space<vmem>>, %arg4: memref<8x1xf32, #tpu.memory_space<vmem>>, %arg5: memref<16x72xf32, #tpu.memory_space<vmem>>, %arg6: memref<16x1xf32, #tpu.memory_space<vmem>>, %arg7: memref<8x144xf32, #tpu.memory_space<vmem>>, %arg8: memref<8x1xf32, #tpu.memory_space<vmem>>, %arg9: memref<8x72xf32, #tpu.memory_space<vmem>>, %arg10: memref<8x1xf32, #tpu.memory_space<vmem>>, %arg11: memref<1x1x256xf32, #tpu.memory_space<vmem>>) attributes {dimension_semantics = [#tpu.dimension_semantics<parallel>], iteration_bounds = array<i64: 2>, scalar_prefetch = 0 : i64, scratch_operands = 0 : i64, tpu.core_type = #tpu.core_type<tc>, window_params = [{transform_indices = @transform_0, window_bounds = array<i64: 1, 4, 256>}, {pipeline_mode = #tpu.pipeline_mode<synchronous>, transform_indices = @transform_1, window_bounds = array<i64: 9, 256>}, {pipeline_mode = #tpu.pipeline_mode<synchronous>, transform_indices = @transform_2, window_bounds = array<i64: 8, 36>}, {pipeline_mode = #tpu.pipeline_mode<synchronous>, transform_indices = @transform_3, window_bounds = array<i64: 8, 1>}, {pipeline_mode = #tpu.pipeline_mode<synchronous>, transform_indices = @transform_4, window_bounds = array<i64: 16, 72>}, {pipeline_mode = #tpu.pipeline_mode<synchronous>, transform_indices = @transform_5, window_bounds = array<i64: 16, 1>}, {pipeline_mode = #tpu.pipeline_mode<synchronous>, transform_indices = @transform_6, window_bounds = array<i64: 8, 144>}, {pipeline_mode = #tpu.pipeline_mode<synchronous>, transform_indices = @transform_7, window_bounds = array<i64: 8, 1>}, {pipeline_mode = #tpu.pipeline_mode<synchronous>, transform_indices = @transform_8, window_bounds = array<i64: 8, 72>}, {pipeline_mode = #tpu.pipeline_mode<synchronous>, transform_indices = @transform_9, window_bounds = array<i64: 8, 1>}, {transform_indices = @transform_10, window_bounds = array<i64: 1, 1, 256>}]} {
    %c0 = arith.constant 0 : index
    %c0_0 = arith.constant 0 : index
    %0 = vector.load %arg2[%c0, %c0_0] : memref<9x256xf32, #tpu.memory_space<vmem>>, vector<9x256xf32>
    %c0_1 = arith.constant 0 : index
    %c0_2 = arith.constant 0 : index
    %c0_3 = arith.constant 0 : index
    %1 = vector.load %arg1[%c0_1, %c0_2, %c0_3] : memref<1x4x256xf32, #tpu.memory_space<vmem>>, vector<1x4x256xf32>
    %2 = vector.shape_cast %1 : vector<1x4x256xf32> to vector<4x256xf32>
    %3 = vector.extract_strided_slice %2 {offsets = [0, 239], sizes = [4, 17], strides = [1, 1]} : vector<4x256xf32> to vector<4x17xf32>
    %4 = vector.extract_strided_slice %2 {offsets = [0, 0], sizes = [4, 239], strides = [1, 1]} : vector<4x256xf32> to vector<4x239xf32>
    %5 = tpu.concatenate %3, %4 in 1 : vector<4x17xf32>, vector<4x239xf32> -> vector<4x256xf32>
    %6 = vector.extract_strided_slice %0 {offsets = [0, 0], sizes = [1, 256], strides = [1, 1]} : vector<9x256xf32> to vector<1x256xf32>
    %7 = vector.broadcast %6 : vector<1x256xf32> to vector<4x256xf32>
    %8 = arith.mulf %5, %7 : vector<4x256xf32>
    %9 = vector.extract_strided_slice %2 {offsets = [0, 240], sizes = [4, 16], strides = [1, 1]} : vector<4x256xf32> to vector<4x16xf32>
    %10 = vector.extract_strided_slice %2 {offsets = [0, 0], sizes = [4, 240], strides = [1, 1]} : vector<4x256xf32> to vector<4x240xf32>
    %11 = tpu.concatenate %9, %10 in 1 : vector<4x16xf32>, vector<4x240xf32> -> vector<4x256xf32>
    %12 = vector.extract_strided_slice %0 {offsets = [1, 0], sizes = [1, 256], strides = [1, 1]} : vector<9x256xf32> to vector<1x256xf32>
    %13 = vector.broadcast %12 : vector<1x256xf32> to vector<4x256xf32>
    %14 = arith.mulf %11, %13 : vector<4x256xf32>
    %15 = vector.extract_strided_slice %2 {offsets = [0, 241], sizes = [4, 15], strides = [1, 1]} : vector<4x256xf32> to vector<4x15xf32>
    %16 = vector.extract_strided_slice %2 {offsets = [0, 0], sizes = [4, 241], strides = [1, 1]} : vector<4x256xf32> to vector<4x241xf32>
    %17 = tpu.concatenate %15, %16 in 1 : vector<4x15xf32>, vector<4x241xf32> -> vector<4x256xf32>
    %18 = vector.extract_strided_slice %0 {offsets = [2, 0], sizes = [1, 256], strides = [1, 1]} : vector<9x256xf32> to vector<1x256xf32>
    %19 = vector.broadcast %18 : vector<1x256xf32> to vector<4x256xf32>
    %20 = arith.mulf %17, %19 : vector<4x256xf32>
    %21 = vector.extract_strided_slice %2 {offsets = [0, 255], sizes = [4, 1], strides = [1, 1]} : vector<4x256xf32> to vector<4x1xf32>
    %22 = vector.extract_strided_slice %2 {offsets = [0, 0], sizes = [4, 255], strides = [1, 1]} : vector<4x256xf32> to vector<4x255xf32>
    %23 = tpu.concatenate %21, %22 in 1 : vector<4x1xf32>, vector<4x255xf32> -> vector<4x256xf32>
    %24 = vector.extract_strided_slice %0 {offsets = [3, 0], sizes = [1, 256], strides = [1, 1]} : vector<9x256xf32> to vector<1x256xf32>
    %25 = vector.broadcast %24 : vector<1x256xf32> to vector<4x256xf32>
    %26 = arith.mulf %23, %25 : vector<4x256xf32>
    %27 = vector.extract_strided_slice %2 {offsets = [0, 1], sizes = [4, 255], strides = [1, 1]} : vector<4x256xf32> to vector<4x255xf32>
    %28 = vector.extract_strided_slice %2 {offsets = [0, 0], sizes = [4, 1], strides = [1, 1]} : vector<4x256xf32> to vector<4x1xf32>
    %29 = tpu.concatenate %27, %28 in 1 : vector<4x255xf32>, vector<4x1xf32> -> vector<4x256xf32>
    %30 = vector.extract_strided_slice %0 {offsets = [5, 0], sizes = [1, 256], strides = [1, 1]} : vector<9x256xf32> to vector<1x256xf32>
    %31 = vector.broadcast %30 : vector<1x256xf32> to vector<4x256xf32>
    %32 = arith.mulf %29, %31 : vector<4x256xf32>
    %33 = vector.extract_strided_slice %2 {offsets = [0, 15], sizes = [4, 241], strides = [1, 1]} : vector<4x256xf32> to vector<4x241xf32>
    %34 = vector.extract_strided_slice %2 {offsets = [0, 0], sizes = [4, 15], strides = [1, 1]} : vector<4x256xf32> to vector<4x15xf32>
    %35 = tpu.concatenate %33, %34 in 1 : vector<4x241xf32>, vector<4x15xf32> -> vector<4x256xf32>
    %36 = vector.extract_strided_slice %0 {offsets = [6, 0], sizes = [1, 256], strides = [1, 1]} : vector<9x256xf32> to vector<1x256xf32>
    %37 = vector.broadcast %36 : vector<1x256xf32> to vector<4x256xf32>
    %38 = arith.mulf %35, %37 : vector<4x256xf32>
    %39 = vector.extract_strided_slice %2 {offsets = [0, 16], sizes = [4, 240], strides = [1, 1]} : vector<4x256xf32> to vector<4x240xf32>
    %40 = vector.extract_strided_slice %2 {offsets = [0, 0], sizes = [4, 16], strides = [1, 1]} : vector<4x256xf32> to vector<4x16xf32>
    %41 = tpu.concatenate %39, %40 in 1 : vector<4x240xf32>, vector<4x16xf32> -> vector<4x256xf32>
    %42 = vector.extract_strided_slice %0 {offsets = [7, 0], sizes = [1, 256], strides = [1, 1]} : vector<9x256xf32> to vector<1x256xf32>
    %43 = vector.broadcast %42 : vector<1x256xf32> to vector<4x256xf32>
    %44 = arith.mulf %41, %43 : vector<4x256xf32>
    %45 = vector.extract_strided_slice %2 {offsets = [0, 17], sizes = [4, 239], strides = [1, 1]} : vector<4x256xf32> to vector<4x239xf32>
    %46 = vector.extract_strided_slice %2 {offsets = [0, 0], sizes = [4, 17], strides = [1, 1]} : vector<4x256xf32> to vector<4x17xf32>
    %47 = tpu.concatenate %45, %46 in 1 : vector<4x239xf32>, vector<4x17xf32> -> vector<4x256xf32>
    %48 = vector.extract_strided_slice %0 {offsets = [8, 0], sizes = [1, 256], strides = [1, 1]} : vector<9x256xf32> to vector<1x256xf32>
    %49 = vector.broadcast %48 : vector<1x256xf32> to vector<4x256xf32>
    %50 = arith.mulf %47, %49 : vector<4x256xf32>
    %51 = tpu.concatenate %8, %14, %20, %26, %2, %32, %38, %44, %50 in 0 : vector<4x256xf32>, vector<4x256xf32>, vector<4x256xf32>, vector<4x256xf32>, vector<4x256xf32>, vector<4x256xf32>, vector<4x256xf32>, vector<4x256xf32>, vector<4x256xf32> -> vector<36x256xf32>
    %c0_4 = arith.constant 0 : index
    %c0_5 = arith.constant 0 : index
    %52 = vector.load %arg3[%c0_4, %c0_5] : memref<8x36xf32, #tpu.memory_space<vmem>>, vector<8x36xf32>
    %cst = arith.constant dense<0.000000e+00> : vector<8x256xf32>
    %53 = tpu.matmul %52, %51, %cst {dimension_numbers = #tpu.dot_dimension_numbers<[1], [0], [0], [1], [0, 0, 1, 1], [], []>} : vector<8x36xf32>, vector<36x256xf32>, vector<8x256xf32> -> vector<8x256xf32>
    %c0_6 = arith.constant 0 : index
    %c0_7 = arith.constant 0 : index
    %54 = vector.load %arg4[%c0_6, %c0_7] : memref<8x1xf32, #tpu.memory_space<vmem>>, vector<8x1xf32>
    %55 = vector.broadcast %54 : vector<8x1xf32> to vector<8x256xf32>
    %56 = arith.addf %53, %55 : vector<8x256xf32>
    %57 = vector.extract_strided_slice %56 {offsets = [0, 239], sizes = [8, 17], strides = [1, 1]} : vector<8x256xf32> to vector<8x17xf32>
    %58 = vector.extract_strided_slice %56 {offsets = [0, 0], sizes = [8, 239], strides = [1, 1]} : vector<8x256xf32> to vector<8x239xf32>
    %59 = tpu.concatenate %57, %58 in 1 : vector<8x17xf32>, vector<8x239xf32> -> vector<8x256xf32>
    %60 = vector.extract_strided_slice %0 {offsets = [0, 0], sizes = [1, 256], strides = [1, 1]} : vector<9x256xf32> to vector<1x256xf32>
    %61 = vector.broadcast %60 : vector<1x256xf32> to vector<8x256xf32>
    %62 = arith.mulf %59, %61 : vector<8x256xf32>
    %63 = vector.extract_strided_slice %56 {offsets = [0, 240], sizes = [8, 16], strides = [1, 1]} : vector<8x256xf32> to vector<8x16xf32>
    %64 = vector.extract_strided_slice %56 {offsets = [0, 0], sizes = [8, 240], strides = [1, 1]} : vector<8x256xf32> to vector<8x240xf32>
    %65 = tpu.concatenate %63, %64 in 1 : vector<8x16xf32>, vector<8x240xf32> -> vector<8x256xf32>
    %66 = vector.extract_strided_slice %0 {offsets = [1, 0], sizes = [1, 256], strides = [1, 1]} : vector<9x256xf32> to vector<1x256xf32>
    %67 = vector.broadcast %66 : vector<1x256xf32> to vector<8x256xf32>
    %68 = arith.mulf %65, %67 : vector<8x256xf32>
    %69 = vector.extract_strided_slice %56 {offsets = [0, 241], sizes = [8, 15], strides = [1, 1]} : vector<8x256xf32> to vector<8x15xf32>
    %70 = vector.extract_strided_slice %56 {offsets = [0, 0], sizes = [8, 241], strides = [1, 1]} : vector<8x256xf32> to vector<8x241xf32>
    %71 = tpu.concatenate %69, %70 in 1 : vector<8x15xf32>, vector<8x241xf32> -> vector<8x256xf32>
    %72 = vector.extract_strided_slice %0 {offsets = [2, 0], sizes = [1, 256], strides = [1, 1]} : vector<9x256xf32> to vector<1x256xf32>
    %73 = vector.broadcast %72 : vector<1x256xf32> to vector<8x256xf32>
    %74 = arith.mulf %71, %73 : vector<8x256xf32>
    %75 = vector.extract_strided_slice %56 {offsets = [0, 255], sizes = [8, 1], strides = [1, 1]} : vector<8x256xf32> to vector<8x1xf32>
    %76 = vector.extract_strided_slice %56 {offsets = [0, 0], sizes = [8, 255], strides = [1, 1]} : vector<8x256xf32> to vector<8x255xf32>
    %77 = tpu.concatenate %75, %76 in 1 : vector<8x1xf32>, vector<8x255xf32> -> vector<8x256xf32>
    %78 = vector.extract_strided_slice %0 {offsets = [3, 0], sizes = [1, 256], strides = [1, 1]} : vector<9x256xf32> to vector<1x256xf32>
    %79 = vector.broadcast %78 : vector<1x256xf32> to vector<8x256xf32>
    %80 = arith.mulf %77, %79 : vector<8x256xf32>
    %81 = vector.extract_strided_slice %56 {offsets = [0, 1], sizes = [8, 255], strides = [1, 1]} : vector<8x256xf32> to vector<8x255xf32>
    %82 = vector.extract_strided_slice %56 {offsets = [0, 0], sizes = [8, 1], strides = [1, 1]} : vector<8x256xf32> to vector<8x1xf32>
    %83 = tpu.concatenate %81, %82 in 1 : vector<8x255xf32>, vector<8x1xf32> -> vector<8x256xf32>
    %84 = vector.extract_strided_slice %0 {offsets = [5, 0], sizes = [1, 256], strides = [1, 1]} : vector<9x256xf32> to vector<1x256xf32>
    %85 = vector.broadcast %84 : vector<1x256xf32> to vector<8x256xf32>
    %86 = arith.mulf %83, %85 : vector<8x256xf32>
    %87 = vector.extract_strided_slice %56 {offsets = [0, 15], sizes = [8, 241], strides = [1, 1]} : vector<8x256xf32> to vector<8x241xf32>
    %88 = vector.extract_strided_slice %56 {offsets = [0, 0], sizes = [8, 15], strides = [1, 1]} : vector<8x256xf32> to vector<8x15xf32>
    %89 = tpu.concatenate %87, %88 in 1 : vector<8x241xf32>, vector<8x15xf32> -> vector<8x256xf32>
    %90 = vector.extract_strided_slice %0 {offsets = [6, 0], sizes = [1, 256], strides = [1, 1]} : vector<9x256xf32> to vector<1x256xf32>
    %91 = vector.broadcast %90 : vector<1x256xf32> to vector<8x256xf32>
    %92 = arith.mulf %89, %91 : vector<8x256xf32>
    %93 = vector.extract_strided_slice %56 {offsets = [0, 16], sizes = [8, 240], strides = [1, 1]} : vector<8x256xf32> to vector<8x240xf32>
    %94 = vector.extract_strided_slice %56 {offsets = [0, 0], sizes = [8, 16], strides = [1, 1]} : vector<8x256xf32> to vector<8x16xf32>
    %95 = tpu.concatenate %93, %94 in 1 : vector<8x240xf32>, vector<8x16xf32> -> vector<8x256xf32>
    %96 = vector.extract_strided_slice %0 {offsets = [7, 0], sizes = [1, 256], strides = [1, 1]} : vector<9x256xf32> to vector<1x256xf32>
    %97 = vector.broadcast %96 : vector<1x256xf32> to vector<8x256xf32>
    %98 = arith.mulf %95, %97 : vector<8x256xf32>
    %99 = vector.extract_strided_slice %56 {offsets = [0, 17], sizes = [8, 239], strides = [1, 1]} : vector<8x256xf32> to vector<8x239xf32>
    %100 = vector.extract_strided_slice %56 {offsets = [0, 0], sizes = [8, 17], strides = [1, 1]} : vector<8x256xf32> to vector<8x17xf32>
    %101 = tpu.concatenate %99, %100 in 1 : vector<8x239xf32>, vector<8x17xf32> -> vector<8x256xf32>
    %102 = vector.extract_strided_slice %0 {offsets = [8, 0], sizes = [1, 256], strides = [1, 1]} : vector<9x256xf32> to vector<1x256xf32>
    %103 = vector.broadcast %102 : vector<1x256xf32> to vector<8x256xf32>
    %104 = arith.mulf %101, %103 : vector<8x256xf32>
    %105 = tpu.concatenate %62, %68, %74, %80, %56, %86, %92, %98, %104 in 0 : vector<8x256xf32>, vector<8x256xf32>, vector<8x256xf32>, vector<8x256xf32>, vector<8x256xf32>, vector<8x256xf32>, vector<8x256xf32>, vector<8x256xf32>, vector<8x256xf32> -> vector<72x256xf32>
    %c0_8 = arith.constant 0 : index
    %c0_9 = arith.constant 0 : index
    %106 = vector.load %arg5[%c0_8, %c0_9] : memref<16x72xf32, #tpu.memory_space<vmem>>, vector<16x72xf32>
    %cst_10 = arith.constant dense<0.000000e+00> : vector<16x256xf32>
    %107 = tpu.matmul %106, %105, %cst_10 {dimension_numbers = #tpu.dot_dimension_numbers<[1], [0], [0], [1], [0, 0, 1, 1], [], []>} : vector<16x72xf32>, vector<72x256xf32>, vector<16x256xf32> -> vector<16x256xf32>
    %c0_11 = arith.constant 0 : index
    %c0_12 = arith.constant 0 : index
    %108 = vector.load %arg6[%c0_11, %c0_12] : memref<16x1xf32, #tpu.memory_space<vmem>>, vector<16x1xf32>
    %109 = vector.broadcast %108 : vector<16x1xf32> to vector<16x256xf32>
    %110 = arith.addf %107, %109 : vector<16x256xf32>
    %cst_13 = arith.constant 0.000000e+00 : f32
    %111 = vector.broadcast %cst_13 : f32 to vector<16x256xf32>
    %112 = arith.maximumf %110, %111 : vector<16x256xf32>
    %113 = vector.extract_strided_slice %112 {offsets = [0, 239], sizes = [16, 17], strides = [1, 1]} : vector<16x256xf32> to vector<16x17xf32>
    %114 = vector.extract_strided_slice %112 {offsets = [0, 0], sizes = [16, 239], strides = [1, 1]} : vector<16x256xf32> to vector<16x239xf32>
    %115 = tpu.concatenate %113, %114 in 1 : vector<16x17xf32>, vector<16x239xf32> -> vector<16x256xf32>
    %116 = vector.extract_strided_slice %0 {offsets = [0, 0], sizes = [1, 256], strides = [1, 1]} : vector<9x256xf32> to vector<1x256xf32>
    %117 = vector.broadcast %116 : vector<1x256xf32> to vector<16x256xf32>
    %118 = arith.mulf %115, %117 : vector<16x256xf32>
    %119 = vector.extract_strided_slice %112 {offsets = [0, 240], sizes = [16, 16], strides = [1, 1]} : vector<16x256xf32> to vector<16x16xf32>
    %120 = vector.extract_strided_slice %112 {offsets = [0, 0], sizes = [16, 240], strides = [1, 1]} : vector<16x256xf32> to vector<16x240xf32>
    %121 = tpu.concatenate %119, %120 in 1 : vector<16x16xf32>, vector<16x240xf32> -> vector<16x256xf32>
    %122 = vector.extract_strided_slice %0 {offsets = [1, 0], sizes = [1, 256], strides = [1, 1]} : vector<9x256xf32> to vector<1x256xf32>
    %123 = vector.broadcast %122 : vector<1x256xf32> to vector<16x256xf32>
    %124 = arith.mulf %121, %123 : vector<16x256xf32>
    %125 = vector.extract_strided_slice %112 {offsets = [0, 241], sizes = [16, 15], strides = [1, 1]} : vector<16x256xf32> to vector<16x15xf32>
    %126 = vector.extract_strided_slice %112 {offsets = [0, 0], sizes = [16, 241], strides = [1, 1]} : vector<16x256xf32> to vector<16x241xf32>
    %127 = tpu.concatenate %125, %126 in 1 : vector<16x15xf32>, vector<16x241xf32> -> vector<16x256xf32>
    %128 = vector.extract_strided_slice %0 {offsets = [2, 0], sizes = [1, 256], strides = [1, 1]} : vector<9x256xf32> to vector<1x256xf32>
    %129 = vector.broadcast %128 : vector<1x256xf32> to vector<16x256xf32>
    %130 = arith.mulf %127, %129 : vector<16x256xf32>
    %131 = vector.extract_strided_slice %112 {offsets = [0, 255], sizes = [16, 1], strides = [1, 1]} : vector<16x256xf32> to vector<16x1xf32>
    %132 = vector.extract_strided_slice %112 {offsets = [0, 0], sizes = [16, 255], strides = [1, 1]} : vector<16x256xf32> to vector<16x255xf32>
    %133 = tpu.concatenate %131, %132 in 1 : vector<16x1xf32>, vector<16x255xf32> -> vector<16x256xf32>
    %134 = vector.extract_strided_slice %0 {offsets = [3, 0], sizes = [1, 256], strides = [1, 1]} : vector<9x256xf32> to vector<1x256xf32>
    %135 = vector.broadcast %134 : vector<1x256xf32> to vector<16x256xf32>
    %136 = arith.mulf %133, %135 : vector<16x256xf32>
    %137 = vector.extract_strided_slice %112 {offsets = [0, 1], sizes = [16, 255], strides = [1, 1]} : vector<16x256xf32> to vector<16x255xf32>
    %138 = vector.extract_strided_slice %112 {offsets = [0, 0], sizes = [16, 1], strides = [1, 1]} : vector<16x256xf32> to vector<16x1xf32>
    %139 = tpu.concatenate %137, %138 in 1 : vector<16x255xf32>, vector<16x1xf32> -> vector<16x256xf32>
    %140 = vector.extract_strided_slice %0 {offsets = [5, 0], sizes = [1, 256], strides = [1, 1]} : vector<9x256xf32> to vector<1x256xf32>
    %141 = vector.broadcast %140 : vector<1x256xf32> to vector<16x256xf32>
    %142 = arith.mulf %139, %141 : vector<16x256xf32>
    %143 = vector.extract_strided_slice %112 {offsets = [0, 15], sizes = [16, 241], strides = [1, 1]} : vector<16x256xf32> to vector<16x241xf32>
    %144 = vector.extract_strided_slice %112 {offsets = [0, 0], sizes = [16, 15], strides = [1, 1]} : vector<16x256xf32> to vector<16x15xf32>
    %145 = tpu.concatenate %143, %144 in 1 : vector<16x241xf32>, vector<16x15xf32> -> vector<16x256xf32>
    %146 = vector.extract_strided_slice %0 {offsets = [6, 0], sizes = [1, 256], strides = [1, 1]} : vector<9x256xf32> to vector<1x256xf32>
    %147 = vector.broadcast %146 : vector<1x256xf32> to vector<16x256xf32>
    %148 = arith.mulf %145, %147 : vector<16x256xf32>
    %149 = vector.extract_strided_slice %112 {offsets = [0, 16], sizes = [16, 240], strides = [1, 1]} : vector<16x256xf32> to vector<16x240xf32>
    %150 = vector.extract_strided_slice %112 {offsets = [0, 0], sizes = [16, 16], strides = [1, 1]} : vector<16x256xf32> to vector<16x16xf32>
    %151 = tpu.concatenate %149, %150 in 1 : vector<16x240xf32>, vector<16x16xf32> -> vector<16x256xf32>
    %152 = vector.extract_strided_slice %0 {offsets = [7, 0], sizes = [1, 256], strides = [1, 1]} : vector<9x256xf32> to vector<1x256xf32>
    %153 = vector.broadcast %152 : vector<1x256xf32> to vector<16x256xf32>
    %154 = arith.mulf %151, %153 : vector<16x256xf32>
    %155 = vector.extract_strided_slice %112 {offsets = [0, 17], sizes = [16, 239], strides = [1, 1]} : vector<16x256xf32> to vector<16x239xf32>
    %156 = vector.extract_strided_slice %112 {offsets = [0, 0], sizes = [16, 17], strides = [1, 1]} : vector<16x256xf32> to vector<16x17xf32>
    %157 = tpu.concatenate %155, %156 in 1 : vector<16x239xf32>, vector<16x17xf32> -> vector<16x256xf32>
    %158 = vector.extract_strided_slice %0 {offsets = [8, 0], sizes = [1, 256], strides = [1, 1]} : vector<9x256xf32> to vector<1x256xf32>
    %159 = vector.broadcast %158 : vector<1x256xf32> to vector<16x256xf32>
    %160 = arith.mulf %157, %159 : vector<16x256xf32>
    %161 = tpu.concatenate %118, %124, %130, %136, %112, %142, %148, %154, %160 in 0 : vector<16x256xf32>, vector<16x256xf32>, vector<16x256xf32>, vector<16x256xf32>, vector<16x256xf32>, vector<16x256xf32>, vector<16x256xf32>, vector<16x256xf32>, vector<16x256xf32> -> vector<144x256xf32>
    %c0_14 = arith.constant 0 : index
    %c0_15 = arith.constant 0 : index
    %162 = vector.load %arg7[%c0_14, %c0_15] : memref<8x144xf32, #tpu.memory_space<vmem>>, vector<8x144xf32>
    %cst_16 = arith.constant dense<0.000000e+00> : vector<8x256xf32>
    %163 = tpu.matmul %162, %161, %cst_16 {dimension_numbers = #tpu.dot_dimension_numbers<[1], [0], [0], [1], [0, 0, 1, 1], [], []>} : vector<8x144xf32>, vector<144x256xf32>, vector<8x256xf32> -> vector<8x256xf32>
    %c0_17 = arith.constant 0 : index
    %c0_18 = arith.constant 0 : index
    %164 = vector.load %arg8[%c0_17, %c0_18] : memref<8x1xf32, #tpu.memory_space<vmem>>, vector<8x1xf32>
    %165 = vector.broadcast %164 : vector<8x1xf32> to vector<8x256xf32>
    %166 = arith.addf %163, %165 : vector<8x256xf32>
    %167 = vector.extract_strided_slice %166 {offsets = [0, 239], sizes = [8, 17], strides = [1, 1]} : vector<8x256xf32> to vector<8x17xf32>
    %168 = vector.extract_strided_slice %166 {offsets = [0, 0], sizes = [8, 239], strides = [1, 1]} : vector<8x256xf32> to vector<8x239xf32>
    %169 = tpu.concatenate %167, %168 in 1 : vector<8x17xf32>, vector<8x239xf32> -> vector<8x256xf32>
    %170 = vector.extract_strided_slice %0 {offsets = [0, 0], sizes = [1, 256], strides = [1, 1]} : vector<9x256xf32> to vector<1x256xf32>
    %171 = vector.broadcast %170 : vector<1x256xf32> to vector<8x256xf32>
    %172 = arith.mulf %169, %171 : vector<8x256xf32>
    %173 = vector.extract_strided_slice %166 {offsets = [0, 240], sizes = [8, 16], strides = [1, 1]} : vector<8x256xf32> to vector<8x16xf32>
    %174 = vector.extract_strided_slice %166 {offsets = [0, 0], sizes = [8, 240], strides = [1, 1]} : vector<8x256xf32> to vector<8x240xf32>
    %175 = tpu.concatenate %173, %174 in 1 : vector<8x16xf32>, vector<8x240xf32> -> vector<8x256xf32>
    %176 = vector.extract_strided_slice %0 {offsets = [1, 0], sizes = [1, 256], strides = [1, 1]} : vector<9x256xf32> to vector<1x256xf32>
    %177 = vector.broadcast %176 : vector<1x256xf32> to vector<8x256xf32>
    %178 = arith.mulf %175, %177 : vector<8x256xf32>
    %179 = vector.extract_strided_slice %166 {offsets = [0, 241], sizes = [8, 15], strides = [1, 1]} : vector<8x256xf32> to vector<8x15xf32>
    %180 = vector.extract_strided_slice %166 {offsets = [0, 0], sizes = [8, 241], strides = [1, 1]} : vector<8x256xf32> to vector<8x241xf32>
    %181 = tpu.concatenate %179, %180 in 1 : vector<8x15xf32>, vector<8x241xf32> -> vector<8x256xf32>
    %182 = vector.extract_strided_slice %0 {offsets = [2, 0], sizes = [1, 256], strides = [1, 1]} : vector<9x256xf32> to vector<1x256xf32>
    %183 = vector.broadcast %182 : vector<1x256xf32> to vector<8x256xf32>
    %184 = arith.mulf %181, %183 : vector<8x256xf32>
    %185 = vector.extract_strided_slice %166 {offsets = [0, 255], sizes = [8, 1], strides = [1, 1]} : vector<8x256xf32> to vector<8x1xf32>
    %186 = vector.extract_strided_slice %166 {offsets = [0, 0], sizes = [8, 255], strides = [1, 1]} : vector<8x256xf32> to vector<8x255xf32>
    %187 = tpu.concatenate %185, %186 in 1 : vector<8x1xf32>, vector<8x255xf32> -> vector<8x256xf32>
    %188 = vector.extract_strided_slice %0 {offsets = [3, 0], sizes = [1, 256], strides = [1, 1]} : vector<9x256xf32> to vector<1x256xf32>
    %189 = vector.broadcast %188 : vector<1x256xf32> to vector<8x256xf32>
    %190 = arith.mulf %187, %189 : vector<8x256xf32>
    %191 = vector.extract_strided_slice %166 {offsets = [0, 1], sizes = [8, 255], strides = [1, 1]} : vector<8x256xf32> to vector<8x255xf32>
    %192 = vector.extract_strided_slice %166 {offsets = [0, 0], sizes = [8, 1], strides = [1, 1]} : vector<8x256xf32> to vector<8x1xf32>
    %193 = tpu.concatenate %191, %192 in 1 : vector<8x255xf32>, vector<8x1xf32> -> vector<8x256xf32>
    %194 = vector.extract_strided_slice %0 {offsets = [5, 0], sizes = [1, 256], strides = [1, 1]} : vector<9x256xf32> to vector<1x256xf32>
    %195 = vector.broadcast %194 : vector<1x256xf32> to vector<8x256xf32>
    %196 = arith.mulf %193, %195 : vector<8x256xf32>
    %197 = vector.extract_strided_slice %166 {offsets = [0, 15], sizes = [8, 241], strides = [1, 1]} : vector<8x256xf32> to vector<8x241xf32>
    %198 = vector.extract_strided_slice %166 {offsets = [0, 0], sizes = [8, 15], strides = [1, 1]} : vector<8x256xf32> to vector<8x15xf32>
    %199 = tpu.concatenate %197, %198 in 1 : vector<8x241xf32>, vector<8x15xf32> -> vector<8x256xf32>
    %200 = vector.extract_strided_slice %0 {offsets = [6, 0], sizes = [1, 256], strides = [1, 1]} : vector<9x256xf32> to vector<1x256xf32>
    %201 = vector.broadcast %200 : vector<1x256xf32> to vector<8x256xf32>
    %202 = arith.mulf %199, %201 : vector<8x256xf32>
    %203 = vector.extract_strided_slice %166 {offsets = [0, 16], sizes = [8, 240], strides = [1, 1]} : vector<8x256xf32> to vector<8x240xf32>
    %204 = vector.extract_strided_slice %166 {offsets = [0, 0], sizes = [8, 16], strides = [1, 1]} : vector<8x256xf32> to vector<8x16xf32>
    %205 = tpu.concatenate %203, %204 in 1 : vector<8x240xf32>, vector<8x16xf32> -> vector<8x256xf32>
    %206 = vector.extract_strided_slice %0 {offsets = [7, 0], sizes = [1, 256], strides = [1, 1]} : vector<9x256xf32> to vector<1x256xf32>
    %207 = vector.broadcast %206 : vector<1x256xf32> to vector<8x256xf32>
    %208 = arith.mulf %205, %207 : vector<8x256xf32>
    %209 = vector.extract_strided_slice %166 {offsets = [0, 17], sizes = [8, 239], strides = [1, 1]} : vector<8x256xf32> to vector<8x239xf32>
    %210 = vector.extract_strided_slice %166 {offsets = [0, 0], sizes = [8, 17], strides = [1, 1]} : vector<8x256xf32> to vector<8x17xf32>
    %211 = tpu.concatenate %209, %210 in 1 : vector<8x239xf32>, vector<8x17xf32> -> vector<8x256xf32>
    %212 = vector.extract_strided_slice %0 {offsets = [8, 0], sizes = [1, 256], strides = [1, 1]} : vector<9x256xf32> to vector<1x256xf32>
    %213 = vector.broadcast %212 : vector<1x256xf32> to vector<8x256xf32>
    %214 = arith.mulf %211, %213 : vector<8x256xf32>
    %215 = tpu.concatenate %172, %178, %184, %190, %166, %196, %202, %208, %214 in 0 : vector<8x256xf32>, vector<8x256xf32>, vector<8x256xf32>, vector<8x256xf32>, vector<8x256xf32>, vector<8x256xf32>, vector<8x256xf32>, vector<8x256xf32>, vector<8x256xf32> -> vector<72x256xf32>
    %c0_19 = arith.constant 0 : index
    %c0_20 = arith.constant 0 : index
    %216 = vector.load %arg9[%c0_19, %c0_20] : memref<8x72xf32, #tpu.memory_space<vmem>>, vector<8x72xf32>
    %cst_21 = arith.constant dense<0.000000e+00> : vector<8x256xf32>
    %217 = tpu.matmul %216, %215, %cst_21 {dimension_numbers = #tpu.dot_dimension_numbers<[1], [0], [0], [1], [0, 0, 1, 1], [], []>} : vector<8x72xf32>, vector<72x256xf32>, vector<8x256xf32> -> vector<8x256xf32>
    %c0_22 = arith.constant 0 : index
    %c0_23 = arith.constant 0 : index
    %218 = vector.load %arg10[%c0_22, %c0_23] : memref<8x1xf32, #tpu.memory_space<vmem>>, vector<8x1xf32>
    %219 = vector.broadcast %218 : vector<8x1xf32> to vector<8x256xf32>
    %220 = arith.addf %217, %219 : vector<8x256xf32>
    %221 = vector.extract_strided_slice %220 {offsets = [0, 0], sizes = [1, 256], strides = [1, 1]} : vector<8x256xf32> to vector<1x256xf32>
    %222 = arith.negf %221 : vector<1x256xf32>
    %223 = math.exp %222 : vector<1x256xf32>
    %cst_24 = arith.constant 1.000000e+00 : f32
    %224 = vector.broadcast %cst_24 : f32 to vector<1x256xf32>
    %225 = arith.addf %224, %223 : vector<1x256xf32>
    %226 = arith.divf %224, %225 : vector<1x256xf32>
    %c0_25 = arith.constant 0 : index
    %c0_26 = arith.constant 0 : index
    %c0_27 = arith.constant 0 : index
    %227 = vector.load %arg11[%c0_25, %c0_26, %c0_27] : memref<1x1x256xf32, #tpu.memory_space<vmem>>, vector<1x1x256xf32>
    %228 = vector.shape_cast %227 : vector<1x1x256xf32> to vector<1x256xf32>
    %229 = vector.shape_cast %226 : vector<1x256xf32> to vector<1x1x256xf32>
    tpu.vector_store %arg11[%c0_25, %c0_26, %c0_27], %229 {strides = array<i32>} : memref<1x1x256xf32, #tpu.memory_space<vmem>>, vector<1x1x256xf32>,
    return
  }
  func.func @transform_0(%arg0: i32) -> (i32, i32, i32) {
    %c0_i32 = arith.constant 0 : i32
    %c0_i32_0 = arith.constant 0 : i32
    %c0_i32_1 = arith.constant 0 : i32
    return %arg0, %c0_i32, %c0_i32_0 : i32, i32, i32
  }
  func.func @transform_1(%arg0: i32) -> (i32, i32) {
    %c0_i32 = arith.constant 0 : i32
    %c0_i32_0 = arith.constant 0 : i32
    %c0_i32_1 = arith.constant 0 : i32
    return %c0_i32, %c0_i32_0 : i32, i32
  }
  func.func @transform_2(%arg0: i32) -> (i32, i32) {
    %c0_i32 = arith.constant 0 : i32
    %c0_i32_0 = arith.constant 0 : i32
    %c0_i32_1 = arith.constant 0 : i32
    return %c0_i32, %c0_i32_0 : i32, i32
  }
  func.func @transform_3(%arg0: i32) -> (i32, i32) {
    %c0_i32 = arith.constant 0 : i32
    %c0_i32_0 = arith.constant 0 : i32
    %c0_i32_1 = arith.constant 0 : i32
    return %c0_i32, %c0_i32_0 : i32, i32
  }
  func.func @transform_4(%arg0: i32) -> (i32, i32) {
    %c0_i32 = arith.constant 0 : i32
    %c0_i32_0 = arith.constant 0 : i32
    %c0_i32_1 = arith.constant 0 : i32
    return %c0_i32, %c0_i32_0 : i32, i32
  }
  func.func @transform_5(%arg0: i32) -> (i32, i32) {
    %c0_i32 = arith.constant 0 : i32
    %c0_i32_0 = arith.constant 0 : i32
    %c0_i32_1 = arith.constant 0 : i32
    return %c0_i32, %c0_i32_0 : i32, i32
  }
  func.func @transform_6(%arg0: i32) -> (i32, i32) {
    %c0_i32 = arith.constant 0 : i32
    %c0_i32_0 = arith.constant 0 : i32
    %c0_i32_1 = arith.constant 0 : i32
    return %c0_i32, %c0_i32_0 : i32, i32
  }
  func.func @transform_7(%arg0: i32) -> (i32, i32) {
    %c0_i32 = arith.constant 0 : i32
    %c0_i32_0 = arith.constant 0 : i32
    %c0_i32_1 = arith.constant 0 : i32
    return %c0_i32, %c0_i32_0 : i32, i32
  }
  func.func @transform_8(%arg0: i32) -> (i32, i32) {
    %c0_i32 = arith.constant 0 : i32
    %c0_i32_0 = arith.constant 0 : i32
    %c0_i32_1 = arith.constant 0 : i32
    return %c0_i32, %c0_i32_0 : i32, i32
  }
  func.func @transform_9(%arg0: i32) -> (i32, i32) {
    %c0_i32 = arith.constant 0 : i32
    %c0_i32_0 = arith.constant 0 : i32
    %c0_i32_1 = arith.constant 0 : i32
    return %c0_i32, %c0_i32_0 : i32, i32
  }
  func.func @transform_10(%arg0: i32) -> (i32, i32, i32) {
    %c0_i32 = arith.constant 0 : i32
    %c0_i32_0 = arith.constant 0 : i32
    %c0_i32_1 = arith.constant 0 : i32
    return %arg0, %c0_i32, %c0_i32_0 : i32, i32, i32
  }
}

</mosaic_0001>

<llo_original>
// kernel: simple_seg_net_forward.1
$region0: #{simple_seg_net_forward.1}
  #allocation0 [shape = 'u32[]', space=smem, size = 0x4, offset = 0x4, fixed_abs, tag = 'smem constant byte address 0x4 - core index']
  #allocation1 [shape = 'u32[144,128]{1,0:T(1,128)}', space=vmem, size = 0x12000, scoped, tag = 'internal scratch']
  %s0 = inlined_call_operand.vmem [shape: f32[2,4,256], index: 0, kind: input, shape index: {}]
  %s1 = inlined_call_operand.vmem [shape: f32[9,256], index: 1, kind: input, shape index: {}]
  %s2 = inlined_call_operand.vmem [shape: f32[8,36], index: 2, kind: input, shape index: {}]
  %s3 = inlined_call_operand.vmem [shape: f32[8,1], index: 3, kind: input, shape index: {}]
  %s4 = inlined_call_operand.vmem [shape: f32[16,72], index: 4, kind: input, shape index: {}]
  %s5 = inlined_call_operand.vmem [shape: f32[16,1], index: 5, kind: input, shape index: {}]
  %s6 = inlined_call_operand.vmem [shape: f32[8,144], index: 6, kind: input, shape index: {}]
  %s7 = inlined_call_operand.vmem [shape: f32[8,1], index: 7, kind: input, shape index: {}]
  %s8 = inlined_call_operand.vmem [shape: f32[8,72], index: 8, kind: input, shape index: {}]
  %s9 = inlined_call_operand.vmem [shape: f32[8,1], index: 9, kind: input, shape index: {}]
  %s10 = inlined_call_operand.vmem [shape: f32[2,1,256], index: 10, kind: output, shape index: {}]
  %s11 = sld [smem:[#allocation0]]
  $region73: #{simple_seg_net_forward.1} parent=0
    _
  %s13 = ssub.s32 1, %s11
  %s14 = scalar_select 0, %s13, %s11
  loop: start=0, step=1, limit=4
  $region2: #{simple_seg_net_forward.1} parent=0 // loop_pre_header
    _
  $region3: #{simple_seg_net_forward.1} parent=0 // loop_header
    %s16 = sphi 0, %s20
    %p17 = scmp.ge.s32.totalorder %s16, 4
    %s26 = sphi 0, %s28
    %s29 = sphi 0, %s26
    %s30 = sphi 0, %s29
    %s46 = sphi 0, %s30
    %s50 = sphi 0, %s50
    %s52 = sphi 0, %s50
    %s53 = sphi 0, %s52
    %s67 = sphi 0, %s53
    %s71 = sphi 0, %s71
    %s73 = sphi 0, %s71
    %s74 = sphi 0, %s73
    %s88 = sphi 0, %s74
    %s92 = sphi 0, %s92
    %s94 = sphi 0, %s92
    %s95 = sphi 0, %s94
    %s109 = sphi 0, %s95
    %s113 = sphi 0, %s113
    %s115 = sphi 0, %s113
    %s116 = sphi 0, %s115
    %s130 = sphi 0, %s116
    %s134 = sphi 0, %s134
    %s136 = sphi 0, %s134
    %s137 = sphi 0, %s136
    %s151 = sphi 0, %s137
    %s155 = sphi 0, %s155
    %s157 = sphi 0, %s155
    %s158 = sphi 0, %s157
    %s172 = sphi 0, %s158
    %s176 = sphi 0, %s176
    %s178 = sphi 0, %s176
    %s179 = sphi 0, %s178
    %s193 = sphi 0, %s179
    %s197 = sphi 0, %s197
    %s199 = sphi 0, %s197
    %s200 = sphi 0, %s199
    %s214 = sphi 0, %s200
    %s218 = sphi 0, %s218
    %s220 = sphi 0, %s218
    %s221 = sphi 0, %s220
    %s235 = sphi 0, %s221
    %s241 = sphi 0, %s243
    %s244 = sphi 0, %s241
    %s245 = sphi 0, %s244
    %s261 = sphi 0, %s245
  $region4: #{simple_seg_net_forward.1} parent=0 // loop_header_branch
    %19 = sbr.rel (%p17) target = $region8
  $region5: #{simple_seg_net_forward.1} parent=0 // loop_body
    %s21 = ssub.s32 %s16, 1
    %s22 = ssub.s32 %s16, 2
    %s23 = sadd.s32 %s16, 1
    %s24 = ssub.s32 %s16, %s23
    %p25 = scmp.eq.s32.totalorder %s24, 0
    %s27 = sadd.s32 %s26, 1
    %s28 = scalar_select %p25, %s26, %s27
    %p31 = pneg %p25
    %p32 = scmp.eq.s32.totalorder %s16, 1
    %p33 = por %p31, %p32
    %p34 = scmp.ne.s32.totalorder %s26, %s29
    %p35 = scmp.eq.s32.totalorder %s16, 0
    %p36 = por %p34, %p35
    %p37 = scmp.ne.s32.totalorder %s26, %s29
    %p38 = scmp.eq.s32.totalorder %s21, 1
    %p39 = por %p37, %p38
    %p40 = scmp.ne.s32.totalorder %s29, %s30
    %p41 = scmp.eq.s32.totalorder %s21, 0
    %p42 = por %p40, %p41
    %p43 = scmp.ne.s32.totalorder %s29, %s30
    %p44 = scmp.eq.s32.totalorder %s22, 1
    %p45 = por %p43, %p44
    %p47 = scmp.ne.s32.totalorder %s30, %s46
    %p48 = scmp.eq.s32.totalorder %s22, 0
    %p49 = por %p47, %p48
    %s51 = sadd.s32 %s50, 1
    %p54 = scmp.eq.s32.totalorder %s16, 1
    %p55 = scmp.ne.s32.totalorder %s50, %s52
    %p56 = scmp.eq.s32.totalorder %s16, 0
    %p57 = por %p55, %p56
    %p58 = scmp.ne.s32.totalorder %s50, %s52
    %p59 = scmp.eq.s32.totalorder %s21, 1
    %p60 = por %p58, %p59
    %p61 = scmp.ne.s32.totalorder %s52, %s53
    %p62 = scmp.eq.s32.totalorder %s21, 0
    %p63 = por %p61, %p62
    %p64 = scmp.ne.s32.totalorder %s52, %s53
    %p65 = scmp.eq.s32.totalorder %s22, 1
    %p66 = por %p64, %p65
    %p68 = scmp.ne.s32.totalorder %s53, %s67
    %p69 = scmp.eq.s32.totalorder %s22, 0
    %p70 = por %p68, %p69
    %s72 = sadd.s32 %s71, 1
    %p75 = scmp.eq.s32.totalorder %s16, 1
    %p76 = scmp.ne.s32.totalorder %s71, %s73
    %p77 = scmp.eq.s32.totalorder %s16, 0
    %p78 = por %p76, %p77
    %p79 = scmp.ne.s32.totalorder %s71, %s73
    %p80 = scmp.eq.s32.totalorder %s21, 1
    %p81 = por %p79, %p80
    %p82 = scmp.ne.s32.totalorder %s73, %s74
    %p83 = scmp.eq.s32.totalorder %s21, 0
    %p84 = por %p82, %p83
    %p85 = scmp.ne.s32.totalorder %s73, %s74
    %p86 = scmp.eq.s32.totalorder %s22, 1
    %p87 = por %p85, %p86
    %p89 = scmp.ne.s32.totalorder %s74, %s88
    %p90 = scmp.eq.s32.totalorder %s22, 0
    %p91 = por %p89, %p90
    %s93 = sadd.s32 %s92, 1
    %p96 = scmp.eq.s32.totalorder %s16, 1
    %p97 = scmp.ne.s32.totalorder %s92, %s94
    %p98 = scmp.eq.s32.totalorder %s16, 0
    %p99 = por %p97, %p98
    %p100 = scmp.ne.s32.totalorder %s92, %s94
    %p101 = scmp.eq.s32.totalorder %s21, 1
    %p102 = por %p100, %p101
    %p103 = scmp.ne.s32.totalorder %s94, %s95
    %p104 = scmp.eq.s32.totalorder %s21, 0
    %p105 = por %p103, %p104
    %p106 = scmp.ne.s32.totalorder %s94, %s95
    %p107 = scmp.eq.s32.totalorder %s22, 1
    %p108 = por %p106, %p107
    %p110 = scmp.ne.s32.totalorder %s95, %s109
    %p111 = scmp.eq.s32.totalorder %s22, 0
    %p112 = por %p110, %p111
    %s114 = sadd.s32 %s113, 1
    %p117 = scmp.eq.s32.totalorder %s16, 1
    %p118 = scmp.ne.s32.totalorder %s113, %s115
    %p119 = scmp.eq.s32.totalorder %s16, 0
    %p120 = por %p118, %p119
    %p121 = scmp.ne.s32.totalorder %s113, %s115
    %p122 = scmp.eq.s32.totalorder %s21, 1
    %p123 = por %p121, %p122
    %p124 = scmp.ne.s32.totalorder %s115, %s116
    %p125 = scmp.eq.s32.totalorder %s21, 0
    %p126 = por %p124, %p125
    %p127 = scmp.ne.s32.totalorder %s115, %s116
    %p128 = scmp.eq.s32.totalorder %s22, 1
    %p129 = por %p127, %p128
    %p131 = scmp.ne.s32.totalorder %s116, %s130
    %p132 = scmp.eq.s32.totalorder %s22, 0
    %p133 = por %p131, %p132
    %s135 = sadd.s32 %s134, 1
    %p138 = scmp.eq.s32.totalorder %s16, 1
    %p139 = scmp.ne.s32.totalorder %s134, %s136
    %p140 = scmp.eq.s32.totalorder %s16, 0
    %p141 = por %p139, %p140
    %p142 = scmp.ne.s32.totalorder %s134, %s136
    %p143 = scmp.eq.s32.totalorder %s21, 1
    %p144 = por %p142, %p143
    %p145 = scmp.ne.s32.totalorder %s136, %s137
    %p146 = scmp.eq.s32.totalorder %s21, 0
    %p147 = por %p145, %p146
    %p148 = scmp.ne.s32.totalorder %s136, %s137
    %p149 = scmp.eq.s32.totalorder %s22, 1
    %p150 = por %p148, %p149
    %p152 = scmp.ne.s32.totalorder %s137, %s151
    %p153 = scmp.eq.s32.totalorder %s22, 0
    %p154 = por %p152, %p153
    %s156 = sadd.s32 %s155, 1
    %p159 = scmp.eq.s32.totalorder %s16, 1
    %p160 = scmp.ne.s32.totalorder %s155, %s157
    %p161 = scmp.eq.s32.totalorder %s16, 0
    %p162 = por %p160, %p161
    %p163 = scmp.ne.s32.totalorder %s155, %s157
    %p164 = scmp.eq.s32.totalorder %s21, 1
    %p165 = por %p163, %p164
    %p166 = scmp.ne.s32.totalorder %s157, %s158
    %p167 = scmp.eq.s32.totalorder %s21, 0
    %p168 = por %p166, %p167
    %p169 = scmp.ne.s32.totalorder %s157, %s158
    %p170 = scmp.eq.s32.totalorder %s22, 1
    %p171 = por %p169, %p170
    %p173 = scmp.ne.s32.totalorder %s158, %s172
    %p174 = scmp.eq.s32.totalorder %s22, 0
    %p175 = por %p173, %p174
    %s177 = sadd.s32 %s176, 1
    %p180 = scmp.eq.s32.totalorder %s16, 1
    %p181 = scmp.ne.s32.totalorder %s176, %s178
    %p182 = scmp.eq.s32.totalorder %s16, 0
    %p183 = por %p181, %p182
    %p184 = scmp.ne.s32.totalorder %s176, %s178
    %p185 = scmp.eq.s32.totalorder %s21, 1
    %p186 = por %p184, %p185
    %p187 = scmp.ne.s32.totalorder %s178, %s179
    %p188 = scmp.eq.s32.totalorder %s21, 0
    %p189 = por %p187, %p188
    %p190 = scmp.ne.s32.totalorder %s178, %s179
    %p191 = scmp.eq.s32.totalorder %s22, 1
    %p192 = por %p190, %p191
    %p194 = scmp.ne.s32.totalorder %s179, %s193
    %p195 = scmp.eq.s32.totalorder %s22, 0
    %p196 = por %p194, %p195
    %s198 = sadd.s32 %s197, 1
    %p201 = scmp.eq.s32.totalorder %s16, 1
    %p202 = scmp.ne.s32.totalorder %s197, %s199
    %p203 = scmp.eq.s32.totalorder %s16, 0
    %p204 = por %p202, %p203
    %p205 = scmp.ne.s32.totalorder %s197, %s199
    %p206 = scmp.eq.s32.totalorder %s21, 1
    %p207 = por %p205, %p206
    %p208 = scmp.ne.s32.totalorder %s199, %s200
    %p209 = scmp.eq.s32.totalorder %s21, 0
    %p210 = por %p208, %p209
    %p211 = scmp.ne.s32.totalorder %s199, %s200
    %p212 = scmp.eq.s32.totalorder %s22, 1
    %p213 = por %p211, %p212
    %p215 = scmp.ne.s32.totalorder %s200, %s214
    %p216 = scmp.eq.s32.totalorder %s22, 0
    %p217 = por %p215, %p216
    %s219 = sadd.s32 %s218, 1
    %p222 = scmp.eq.s32.totalorder %s16, 1
    %p223 = scmp.ne.s32.totalorder %s218, %s220
    %p224 = scmp.eq.s32.totalorder %s16, 0
    %p225 = por %p223, %p224
    %p226 = scmp.ne.s32.totalorder %s218, %s220
    %p227 = scmp.eq.s32.totalorder %s21, 1
    %p228 = por %p226, %p227
    %p229 = scmp.ne.s32.totalorder %s220, %s221
    %p230 = scmp.eq.s32.totalorder %s21, 0
    %p231 = por %p229, %p230
    %p232 = scmp.ne.s32.totalorder %s220, %s221
    %p233 = scmp.eq.s32.totalorder %s22, 1
    %p234 = por %p232, %p233
    %p236 = scmp.ne.s32.totalorder %s221, %s235
    %p237 = scmp.eq.s32.totalorder %s22, 0
    %p238 = por %p236, %p237
    %s239 = ssub.s32 %s16, %s23
    %p240 = scmp.eq.s32.totalorder %s239, 0
    %s242 = sadd.s32 %s241, 1
    %s243 = scalar_select %p240, %s241, %s242
    %p246 = pneg %p240
    %p247 = scmp.eq.s32.totalorder %s16, 1
    %p248 = por %p246, %p247
    %p249 = scmp.ne.s32.totalorder %s241, %s244
    %p250 = scmp.eq.s32.totalorder %s16, 0
    %p251 = por %p249, %p250
    %p252 = scmp.ne.s32.totalorder %s241, %s244
    %p253 = scmp.eq.s32.totalorder %s21, 1
    %p254 = por %p252, %p253
    %p255 = scmp.ne.s32.totalorder %s244, %s245
    %p256 = scmp.eq.s32.totalorder %s21, 0
    %p257 = por %p255, %p256
    %p258 = scmp.ne.s32.totalorder %s244, %s245
    %p259 = scmp.eq.s32.totalorder %s22, 1
    %p260 = por %p258, %p259
    %p262 = scmp.ne.s32.totalorder %s245, %s261
    %p263 = scmp.eq.s32.totalorder %s22, 0
    %p264 = por %p262, %p263
    %p265 = scmp.le.s32.totalorder 1, %s16
    %p266 = scmp.lt.s32.totalorder %s16, 3
    %p267 = pnand %p265, %p266
    %p268 = pneg %p267
    // Predicated region
    $region9: #{simple_seg_net_forward.1} parent=5 // pred_check
      _
    $region10: #{simple_seg_net_forward.1} parent=5 // pred_check_branch
      %270 = sbr.rel (%p267) target = $region12
    $region11: #{simple_seg_net_forward.1} parent=5 // pred_region
      %s271 = ssub.s32 %s16, 1
      // Predicated region
      $region13: #{simple_seg_net_forward.1} parent=11 // pred_check
        %p272 = pneg %p63
      $region14: #{simple_seg_net_forward.1} parent=11 // pred_check_branch
        %274 = sbr.rel (%p272) target = $region16
      $region15: #{simple_seg_net_forward.1} parent=11 // pred_region
        _
      $region16: #{simple_seg_net_forward.1} parent=11 // pred_fallthru
        _
      // Predicated region
      $region17: #{simple_seg_net_forward.1} parent=11 // pred_check
        %p275 = pneg %p84
      $region18: #{simple_seg_net_forward.1} parent=11 // pred_check_branch
        %277 = sbr.rel (%p275) target = $region20
      $region19: #{simple_seg_net_forward.1} parent=11 // pred_region
        _
      $region20: #{simple_seg_net_forward.1} parent=11 // pred_fallthru
        _
      // Predicated region
      $region21: #{simple_seg_net_forward.1} parent=11 // pred_check
        %p278 = pneg %p105
      $region22: #{simple_seg_net_forward.1} parent=11 // pred_check_branch
        %280 = sbr.rel (%p278) target = $region24
      $region23: #{simple_seg_net_forward.1} parent=11 // pred_region
        _
      $region24: #{simple_seg_net_forward.1} parent=11 // pred_fallthru
        _
      // Predicated region
      $region25: #{simple_seg_net_forward.1} parent=11 // pred_check
        %p281 = pneg %p126
      $region26: #{simple_seg_net_forward.1} parent=11 // pred_check_branch
        %283 = sbr.rel (%p281) target = $region28
      $region27: #{simple_seg_net_forward.1} parent=11 // pred_region
        _
      $region28: #{simple_seg_net_forward.1} parent=11 // pred_fallthru
        _
      // Predicated region
      $region29: #{simple_seg_net_forward.1} parent=11 // pred_check
        %p284 = pneg %p147
      $region30: #{simple_seg_net_forward.1} parent=11 // pred_check_branch
        %286 = sbr.rel (%p284) target = $region32
      $region31: #{simple_seg_net_forward.1} parent=11 // pred_region
        _
      $region32: #{simple_seg_net_forward.1} parent=11 // pred_fallthru
        _
      // Predicated region
      $region33: #{simple_seg_net_forward.1} parent=11 // pred_check
        %p287 = pneg %p168
      $region34: #{simple_seg_net_forward.1} parent=11 // pred_check_branch
        %289 = sbr.rel (%p287) target = $region36
      $region35: #{simple_seg_net_forward.1} parent=11 // pred_region
        _
      $region36: #{simple_seg_net_forward.1} parent=11 // pred_fallthru
        _
      // Predicated region
      $region37: #{simple_seg_net_forward.1} parent=11 // pred_check
        %p290 = pneg %p189
      $region38: #{simple_seg_net_forward.1} parent=11 // pred_check_branch
        %292 = sbr.rel (%p290) target = $region40
      $region39: #{simple_seg_net_forward.1} parent=11 // pred_region
        _
      $region40: #{simple_seg_net_forward.1} parent=11 // pred_fallthru
        _
      // Predicated region
      $region41: #{simple_seg_net_forward.1} parent=11 // pred_check
        %p293 = pneg %p210
      $region42: #{simple_seg_net_forward.1} parent=11 // pred_check_branch
        %295 = sbr.rel (%p293) target = $region44
      $region43: #{simple_seg_net_forward.1} parent=11 // pred_region
        _
      $region44: #{simple_seg_net_forward.1} parent=11 // pred_fallthru
        _
      // Predicated region
      $region45: #{simple_seg_net_forward.1} parent=11 // pred_check
        %p296 = pneg %p231
      $region46: #{simple_seg_net_forward.1} parent=11 // pred_check_branch
        %298 = sbr.rel (%p296) target = $region48
      $region47: #{simple_seg_net_forward.1} parent=11 // pred_region
        _
      $region48: #{simple_seg_net_forward.1} parent=11 // pred_fallthru
        _
    $region12: #{simple_seg_net_forward.1} parent=5 // pred_fallthru
      _
    %p299 = scmp.lt.s32.totalorder %s16, 2
    // Predicated region
    $region49: #{simple_seg_net_forward.1} parent=5 // pred_check
      %p300 = pneg %p299
    $region50: #{simple_seg_net_forward.1} parent=5 // pred_check_branch
      %302 = sbr.rel (%p300) target = $region52
    $region51: #{simple_seg_net_forward.1} parent=5 // pred_region
      // Predicated region
      $region53: #{simple_seg_net_forward.1} parent=51 // pred_check
        %p303 = pneg %p36
      $region54: #{simple_seg_net_forward.1} parent=51 // pred_check_branch
        %305 = sbr.rel (%p303) target = $region56
      $region55: #{simple_seg_net_forward.1} parent=51 // pred_region
        %p306 = scmp.lt.s32.totalorder %s16, 1
        %s307 = scalar_select %p306, %s16, 1
        %s308 = smul.addr %s307, 2
        %s309 = smul.addr %s308, 4
        %s310 = scalar_lea.vmem %s0, %s309
      $region56: #{simple_seg_net_forward.1} parent=51 // pred_fallthru
        _
    $region52: #{simple_seg_net_forward.1} parent=5 // pred_fallthru
      _
    %p311 = scmp.le.s32.totalorder 1, %s16
    %p312 = scmp.lt.s32.totalorder %s16, 3
    %p313 = pnand %p311, %p312
    %p314 = pneg %p313
    // Predicated region
    $region57: #{simple_seg_net_forward.1} parent=5 // pred_check
      _
    $region58: #{simple_seg_net_forward.1} parent=5 // pred_check_branch
      %316 = sbr.rel (%p313) target = $region60
    $region59: #{simple_seg_net_forward.1} parent=5 // pred_region
      %s317 = ssub.s32 %s16, 1
      %p318 = scmp.lt.s32.totalorder %s21, 1
      %s319 = scalar_select %p318, %s21, 1
      %s320 = smul.addr %s319, 2
      %s321 = smul.addr %s320, 4
      %s322 = scalar_lea.vmem %s0, %s321
      %p323 = pneg %p42
      %p324 = pneg %p39
      %p325 = pneg %p63
      %p326 = pneg %p60
      %p327 = pneg %p84
      %p328 = pneg %p81
      %p329 = pneg %p105
      %p330 = pneg %p102
      %p331 = pneg %p126
      %p332 = pneg %p123
      %p333 = pneg %p147
      %p334 = pneg %p144
      %p335 = pneg %p168
      %p336 = pneg %p165
      %p337 = pneg %p189
      %p338 = pneg %p186
      %p339 = pneg %p210
      %p340 = pneg %p207
      %p341 = pneg %p231
      %p342 = pneg %p228
      %p343 = pneg %p257
      %p344 = pneg %p254
      %p345 = scmp.lt.s32.totalorder %s21, 1
      %s346 = scalar_select %p345, %s21, 1
      %s347 = smul.addr %s346, 2
      %s348 = scalar_lea.vmem %s10, %s347
      %p349 = scmp.lt.s32.totalorder %s21, 1
      %s350 = scalar_select %p349, %s21, 1
      %s351 = smul.addr %s350, 2
      %s352 = smul.addr %s351, 4
      %s353 = scalar_lea.vmem %s0, %s352
      %p354 = scmp.lt.s32.totalorder %s21, 1
      %s355 = scalar_select %p354, %s21, 1
      %s356 = smul.addr %s355, 2
      %s357 = scalar_lea.vmem %s10, %s356
      %v358 = vld [vmem:[%s1] sm:$0xff]
      %v359 = vld [vmem:[%s1 + $0x8] sm:$0xff]
      %v360 = vld [vmem:[%s1 + $0x10] sm:$0x1]
      %v361 = vld [vmem:[%s1 + $0x18] sm:$0x1]
      %v362 = vld [vmem:[%s353] sm:$0xff]
      %v364 = vcombine.high %v362, %v362
      %365 = vrot.lane.b32.xlu0 %v364, 17
      %v366 = vpop.permute.xlu0 %365
      %368 = vrot.lane.b32.xlu0 %v362, 17
      %v369 = vpop.permute.xlu0 %368
      %vm370 = vcmask 138240
      %v371 = vsel %vm370, %v369, %v366
      %v374 = vsel %vm370, %v366, %v369
      %v375 = vlaneseq
      %v376 = vshrl.u32 %v375, 7
      %v377 = vsub.s32 0, %v376
      %v378 = vrot.slane %v358, %v377
      %v379 = vlaneseq
      %v380 = vshrl.u32 %v379, 7
      %v381 = vsub.s32 0, %v380
      %v382 = vrot.slane %v359, %v381
      %v383 = vmul.f32 %v374, %v378
      %v384 = vmul.f32 %v371, %v382
      %385 = vrot.lane.b32.xlu0 %v364, 16
      %v386 = vpop.permute.xlu0 %385
      %388 = vrot.lane.b32.xlu0 %v362, 16
      %v389 = vpop.permute.xlu0 %388
      %vm390 = vcmask 130048
      %v391 = vsel %vm390, %v389, %v386
      %v394 = vsel %vm390, %v386, %v389
      %v395 = vlaneseq
      %v396 = vshrl.u32 %v395, 7
      %v397 = vsub.s32 1, %v396
      %v398 = vrot.slane %v358, %v397
      %v399 = vlaneseq
      %v400 = vshrl.u32 %v399, 7
      %v401 = vsub.s32 1, %v400
      %v402 = vrot.slane %v359, %v401
      %v403 = vmul.f32 %v394, %v398
      %v404 = vmul.f32 %v391, %v402
      %405 = vrot.lane.b32.xlu0 %v364, 15
      %v406 = vpop.permute.xlu0 %405
      %408 = vrot.lane.b32.xlu0 %v362, 15
      %v409 = vpop.permute.xlu0 %408
      %vm410 = vcmask 121856
      %v411 = vsel %vm410, %v409, %v406
      %v414 = vsel %vm410, %v406, %v409
      %v415 = vlaneseq
      %v416 = vshrl.u32 %v415, 7
      %v417 = vsub.s32 2, %v416
      %v418 = vrot.slane %v358, %v417
      %v419 = vlaneseq
      %v420 = vshrl.u32 %v419, 7
      %v421 = vsub.s32 2, %v420
      %v422 = vrot.slane %v359, %v421
      %v423 = vmul.f32 %v414, %v418
      %v424 = vmul.f32 %v411, %v422
      %425 = vrot.lane.b32.xlu0 %v364, 1
      %v426 = vpop.permute.xlu0 %425
      %428 = vrot.lane.b32.xlu0 %v362, 1
      %v429 = vpop.permute.xlu0 %428
      %vm430 = vcmask 7168
      %v431 = vsel %vm430, %v429, %v426
      %v434 = vsel %vm430, %v426, %v429
      %v435 = vlaneseq
      %v436 = vshrl.u32 %v435, 7
      %v437 = vsub.s32 3, %v436
      %v438 = vrot.slane %v358, %v437
      %v439 = vlaneseq
      %v440 = vshrl.u32 %v439, 7
      %v441 = vsub.s32 3, %v440
      %v442 = vrot.slane %v359, %v441
      %v443 = vmul.f32 %v434, %v438
      %v444 = vmul.f32 %v431, %v442
      %445 = vrot.lane.b32.xlu0 %v362, 127
      %v446 = vpop.permute.xlu0 %445
      %447 = vrot.lane.b32.xlu0 %v364, 127
      %v448 = vpop.permute.xlu0 %447
      %vm449 = vcmask 1039360
      %v450 = vsel %vm449, %v446, %v448
      %v454 = vsel %vm449, %v448, %v446
      %v455 = vlaneseq
      %v456 = vshrl.u32 %v455, 7
      %v457 = vsub.s32 5, %v456
      %v458 = vrot.slane %v358, %v457
      %v459 = vlaneseq
      %v460 = vshrl.u32 %v459, 7
      %v461 = vsub.s32 5, %v460
      %v462 = vrot.slane %v359, %v461
      %v463 = vmul.f32 %v450, %v458
      %v464 = vmul.f32 %v454, %v462
      %465 = vrot.lane.b32.xlu0 %v362, 113
      %v466 = vpop.permute.xlu0 %465
      %467 = vrot.lane.b32.xlu0 %v364, 113
      %v468 = vpop.permute.xlu0 %467
      %vm469 = vcmask 924672
      %v470 = vsel %vm469, %v466, %v468
      %v474 = vsel %vm469, %v468, %v466
      %v475 = vlaneseq
      %v476 = vshrl.u32 %v475, 7
      %v477 = vsub.s32 6, %v476
      %v478 = vrot.slane %v358, %v477
      %v479 = vlaneseq
      %v480 = vshrl.u32 %v479, 7
      %v481 = vsub.s32 6, %v480
      %v482 = vrot.slane %v359, %v481
      %v483 = vmul.f32 %v470, %v478
      %v484 = vmul.f32 %v474, %v482
      %485 = vrot.lane.b32.xlu0 %v362, 112
      %v486 = vpop.permute.xlu0 %485
      %487 = vrot.lane.b32.xlu0 %v364, 112
      %v488 = vpop.permute.xlu0 %487
      %vm489 = vcmask 916480
      %v490 = vsel %vm489, %v486, %v488
      %v494 = vsel %vm489, %v488, %v486
      %v495 = vlaneseq
      %v496 = vshrl.u32 %v495, 7
      %v497 = vsub.s32 7, %v496
      %v498 = vrot.slane %v358, %v497
      %v499 = vlaneseq
      %v500 = vshrl.u32 %v499, 7
      %v501 = vsub.s32 7, %v500
      %v502 = vrot.slane %v359, %v501
      %v503 = vmul.f32 %v490, %v498
      %v504 = vmul.f32 %v494, %v502
      %505 = vrot.lane.b32.xlu0 %v362, 111
      %v506 = vpop.permute.xlu0 %505
      %507 = vrot.lane.b32.xlu0 %v364, 111
      %v508 = vpop.permute.xlu0 %507
      %vm509 = vcmask 908288
      %v510 = vsel %vm509, %v506, %v508
      %v514 = vsel %vm509, %v508, %v506
      %v515 = vlaneseq
      %v516 = vshrl.u32 %v515, 7
      %v517 = vsub.s32 0, %v516
      %v518 = vrot.slane %v360, %v517
      %v519 = vlaneseq
      %v520 = vshrl.u32 %v519, 7
      %v521 = vsub.s32 0, %v520
      %v522 = vrot.slane %v361, %v521
      %v523 = vmul.f32 %v510, %v518
      %v524 = vmul.f32 %v514, %v522
      %v527 = vrot.slane %v403, 4
      %v528 = vrot.slane %v404, 4
      %v533 = vrot.slane %v443, 4
      %v534 = vrot.slane %v444, 4
      %v540 = vrot.slane %v463, 4
      %v541 = vrot.slane %v464, 4
      %v546 = vrot.slane %v503, 4
      %v547 = vrot.slane %v504, 4
      %vm550 = vcmask 1043456
      %v551 = vsel %vm550, %v383, %v527
      %v552 = vsel %vm550, %v384, %v528
      %v553 = vsel %vm550, %v423, %v533
      %v554 = vsel %vm550, %v424, %v534
      %v555 = vsel %vm550, %v362, %v540
      %v556 = vsel %vm550, %v364, %v541
      %v557 = vsel %vm550, %v483, %v546
      %v558 = vsel %vm550, %v484, %v547
      %v559 = vld [vmem:[%s2] sm:$0xff]
      %v560 = vld [vmem:[%s3] sm:$0xff]
      %562 = vset.pattern.permute.xlu0 0
      %563 = vperm.xlu0 %562, %v560
      %v564 = vpop.permute.xlu0 %563
      %vm566 = vcmask 293888
      %v568 = vsel %vm566, %v559, 0
      %v571 = vsel %vm550, %v523, 0
      %v574 = vsel %vm550, %v524, 0
      %576 = vmatprep.subr.mxu0 %v552
      %577 = vmatpush1.msra.mxu0 %v551
      %578 = vmatprep.subr.mxu0 %v554
      %579 = vmatpush1.msra.mxu0 %v553
      %580 = vmatprep.subr.mxu0 %v556
      %581 = vmatpush1.msra.mxu0 %v555
      %582 = vmatprep.subr.mxu0 %v558
      %583 = vmatpush1.msra.mxu0 %v557
      %584 = vmatprep.subr.mxu0 %v574
      %585 = vmatpush1.msra.mxu0 %v571
      %586 = vmatprep.subr.mxu0 0.0
      %587 = vmatpush1.msra.mxu0 0.0
      %588 = vmatprep.subr.mxu0 0.0
      %589 = vmatpush1.msra.mxu0 0.0
      %590 = vmatprep.subr.mxu0 0.0
      %591 = vmatpush1.msra.mxu0 0.0
      %592 = vmatprep.subr.mxu0 0.0
      %593 = vmatpush1.msra.mxu0 0.0
      %594 = vmatprep.subr.mxu0 0.0
      %595 = vmatpush1.msra.mxu0 0.0
      %596 = vmatprep.subr.mxu0 0.0
      %597 = vmatpush1.msra.mxu0 0.0
      %598 = vmatprep.subr.mxu0 0.0
      %599 = vmatpush1.msra.mxu0 0.0
      %600 = vmatprep.subr.mxu0 0.0
      %601 = vmatpush1.msra.mxu0 0.0
      %602 = vmatprep.subr.mxu0 0.0
      %603 = vmatpush1.msra.mxu0 0.0
      %604 = vmatprep.subr.mxu0 0.0
      %605 = vmatpush1.msra.mxu0 0.0
      %606 = vmatprep.subr.mxu0 0.0
      %607 = vmatpush1.msra.mxu0 0.0
      %608 = vmatprep.subr.mxu0 0.0
      %609 = vmatpush1.msra.mxu0 0.0
      %610 = vmatprep.subr.mxu0 0.0
      %611 = vmatpush1.msra.mxu0 0.0
      %612 = vmatprep.subr.mxu0 0.0
      %613 = vmatpush1.msra.mxu0 0.0
      %614 = vmatprep.subr.mxu0 0.0
      %615 = vmatpush1.msra.mxu0 0.0
      %616 = vmatprep.subr.mxu0 0.0
      %617 = vmatpush1.msra.mxu0 0.0
      %618 = vmatprep.subr.mxu0 0.0
      %619 = vmatpush1.msra.mxu0 0.0
      %620 = vmatprep.subr.mxu0 0.0
      %621 = vmatpush1.msra.mxu0 0.0
      %622 = vmatprep.subr.mxu0 0.0
      %623 = vmatpush1.msra.mxu0 0.0
      %624 = vmatprep.subr.mxu0 0.0
      %625 = vmatpush1.msra.mxu0 0.0
      %626 = vmatprep.subr.mxu0 0.0
      %627 = vmatpush1.msra.mxu0 0.0
      %628 = vmatprep.subr.mxu0 0.0
      %629 = vmatpush1.msra.mxu0 0.0
      %630 = vmatprep.subr.mxu0 0.0
      %631 = vmatpush1.msra.mxu0 0.0
      %632 = vmatprep.subr.mxu0 0.0
      %633 = vmatpush1.msra.mxu0 0.0
      %634 = vmatprep.subr.mxu0 0.0
      %635 = vmatpush1.msra.mxu0 0.0
      %636 = vmatprep.subr.mxu0 0.0
      %637 = vmatpush1.msra.mxu0 0.0
      %638 = vmatprep.subr.mxu0 0.0
      %639 = vmatpush1.msra.mxu0 0.0
      %640 = vmatprep.mubr.f32.mxu0 0.0
      %641 = vmatmul.mubr.f32.gmra.mrb[0].mxu0 %v568
      %v642 = vpop.f32.mrb[0].mxu0
      %v643 = vadd.f32 %v564, %v642
      %v644 = vpop.f32.mrb[0].mxu0
      %v645 = vadd.f32 %v564, %v644
      %646 = vdwg.mxu0
      %648 = vrot.lane.b32.xlu0 %v645, 17
      %v649 = vpop.permute.xlu0 %648
      %652 = vrot.lane.b32.xlu0 %v643, 17
      %v653 = vpop.permute.xlu0 %652
      %v654 = vsel %vm370, %v653, %v649
      %v657 = vsel %vm370, %v649, %v653
      %v658 = vmul.f32 %v657, %v378
      %v659 = vmul.f32 %v654, %v382
      %660 = vrot.lane.b32.xlu0 %v645, 16
      %v661 = vpop.permute.xlu0 %660
      %663 = vrot.lane.b32.xlu0 %v643, 16
      %v664 = vpop.permute.xlu0 %663
      %v665 = vsel %vm390, %v664, %v661
      %v668 = vsel %vm390, %v661, %v664
      %v669 = vmul.f32 %v668, %v398
      %v670 = vmul.f32 %v665, %v402
      %671 = vrot.lane.b32.xlu0 %v645, 15
      %v672 = vpop.permute.xlu0 %671
      %674 = vrot.lane.b32.xlu0 %v643, 15
      %v675 = vpop.permute.xlu0 %674
      %v676 = vsel %vm410, %v675, %v672
      %v679 = vsel %vm410, %v672, %v675
      %v680 = vmul.f32 %v679, %v418
      %v681 = vmul.f32 %v676, %v422
      %682 = vrot.lane.b32.xlu0 %v645, 1
      %v683 = vpop.permute.xlu0 %682
      %685 = vrot.lane.b32.xlu0 %v643, 1
      %v686 = vpop.permute.xlu0 %685
      %v687 = vsel %vm430, %v686, %v683
      %v690 = vsel %vm430, %v683, %v686
      %v691 = vmul.f32 %v690, %v438
      %v692 = vmul.f32 %v687, %v442
      %693 = vrot.lane.b32.xlu0 %v643, 127
      %v694 = vpop.permute.xlu0 %693
      %695 = vrot.lane.b32.xlu0 %v645, 127
      %v696 = vpop.permute.xlu0 %695
      %v697 = vsel %vm449, %v694, %v696
      %v701 = vsel %vm449, %v696, %v694
      %v702 = vmul.f32 %v697, %v458
      %v703 = vmul.f32 %v701, %v462
      %704 = vrot.lane.b32.xlu0 %v643, 113
      %v705 = vpop.permute.xlu0 %704
      %706 = vrot.lane.b32.xlu0 %v645, 113
      %v707 = vpop.permute.xlu0 %706
      %v708 = vsel %vm469, %v705, %v707
      %v712 = vsel %vm469, %v707, %v705
      %v713 = vmul.f32 %v708, %v478
      %v714 = vmul.f32 %v712, %v482
      %715 = vrot.lane.b32.xlu0 %v643, 112
      %v716 = vpop.permute.xlu0 %715
      %717 = vrot.lane.b32.xlu0 %v645, 112
      %v718 = vpop.permute.xlu0 %717
      %v719 = vsel %vm489, %v716, %v718
      %v723 = vsel %vm489, %v718, %v716
      %v724 = vmul.f32 %v719, %v498
      %v725 = vmul.f32 %v723, %v502
      %726 = vrot.lane.b32.xlu0 %v643, 111
      %v727 = vpop.permute.xlu0 %726
      %728 = vrot.lane.b32.xlu0 %v645, 111
      %v729 = vpop.permute.xlu0 %728
      %v730 = vsel %vm509, %v727, %v729
      %v734 = vsel %vm509, %v729, %v727
      %v735 = vmul.f32 %v730, %v518
      %v736 = vmul.f32 %v734, %v522
      %v737 = vld [vmem:[%s4] sm:$0xff]
      %v738 = vld [vmem:[%s4 + $0x8] sm:$0xff]
      %v739 = vld [vmem:[%s5] sm:$0xff]
      %v740 = vld [vmem:[%s5 + $0x8] sm:$0xff]
      %742 = vset.pattern.permute.xlu0 0
      %743 = vperm.xlu0 %742, %v739
      %v744 = vpop.permute.xlu0 %743
      %747 = vset.pattern.permute.xlu0 0
      %748 = vperm.xlu0 %747, %v740
      %v749 = vpop.permute.xlu0 %748
      %vm751 = vcmask 588800
      %v753 = vsel %vm751, %v737, 0
      %v756 = vsel %vm751, %v738, 0
      %758 = vmatprep.subr.mxu0 %v659
      %759 = vmatpush1.msra.mxu0 %v658
      %760 = vmatprep.subr.mxu0 %v670
      %761 = vmatpush1.msra.mxu0 %v669
      %762 = vmatprep.subr.mxu0 %v681
      %763 = vmatpush1.msra.mxu0 %v680
      %764 = vmatprep.subr.mxu0 %v692
      %765 = vmatpush1.msra.mxu0 %v691
      %766 = vmatprep.subr.mxu0 %v645
      %767 = vmatpush1.msra.mxu0 %v643
      %768 = vmatprep.subr.mxu0 %v703
      %769 = vmatpush1.msra.mxu0 %v702
      %770 = vmatprep.subr.mxu0 %v714
      %771 = vmatpush1.msra.mxu0 %v713
      %772 = vmatprep.subr.mxu0 %v725
      %773 = vmatpush1.msra.mxu0 %v724
      %774 = vmatprep.subr.mxu0 %v736
      %775 = vmatpush1.msra.mxu0 %v735
      %776 = vmatprep.subr.mxu0 0.0
      %777 = vmatpush1.msra.mxu0 0.0
      %778 = vmatprep.subr.mxu0 0.0
      %779 = vmatpush1.msra.mxu0 0.0
      %780 = vmatprep.subr.mxu0 0.0
      %781 = vmatpush1.msra.mxu0 0.0
      %782 = vmatprep.subr.mxu0 0.0
      %783 = vmatpush1.msra.mxu0 0.0
      %784 = vmatprep.subr.mxu0 0.0
      %785 = vmatpush1.msra.mxu0 0.0
      %786 = vmatprep.subr.mxu0 0.0
      %787 = vmatpush1.msra.mxu0 0.0
      %788 = vmatprep.subr.mxu0 0.0
      %789 = vmatpush1.msra.mxu0 0.0
      %790 = vmatprep.subr.mxu0 0.0
      %791 = vmatpush1.msra.mxu0 0.0
      %792 = vmatprep.subr.mxu0 0.0
      %793 = vmatpush1.msra.mxu0 0.0
      %794 = vmatprep.subr.mxu0 0.0
      %795 = vmatpush1.msra.mxu0 0.0
      %796 = vmatprep.subr.mxu0 0.0
      %797 = vmatpush1.msra.mxu0 0.0
      %798 = vmatprep.subr.mxu0 0.0
      %799 = vmatpush1.msra.mxu0 0.0
      %800 = vmatprep.subr.mxu0 0.0
      %801 = vmatpush1.msra.mxu0 0.0
      %802 = vmatprep.subr.mxu0 0.0
      %803 = vmatpush1.msra.mxu0 0.0
      %804 = vmatprep.subr.mxu0 0.0
      %805 = vmatpush1.msra.mxu0 0.0
      %806 = vmatprep.subr.mxu0 0.0
      %807 = vmatpush1.msra.mxu0 0.0
      %808 = vmatprep.subr.mxu0 0.0
      %809 = vmatpush1.msra.mxu0 0.0
      %810 = vmatprep.subr.mxu0 0.0
      %811 = vmatpush1.msra.mxu0 0.0
      %812 = vmatprep.subr.mxu0 0.0
      %813 = vmatpush1.msra.mxu0 0.0
      %814 = vmatprep.subr.mxu0 0.0
      %815 = vmatpush1.msra.mxu0 0.0
      %816 = vmatprep.subr.mxu0 0.0
      %817 = vmatpush1.msra.mxu0 0.0
      %818 = vmatprep.subr.mxu0 0.0
      %819 = vmatpush1.msra.mxu0 0.0
      %820 = vmatprep.subr.mxu0 0.0
      %821 = vmatpush1.msra.mxu0 0.0
      %822 = vmatprep.mubr.f32.mxu0 0.0
      %823 = vmatmul.mubr.f32.gmra.mrb[0].mxu0 %v753
      %v824 = vpop.f32.mrb[0].mxu0
      %v825 = vadd.f32 %v744, %v824
      %v826 = vpop.f32.mrb[0].mxu0
      %v827 = vadd.f32 %v744, %v826
      %828 = vmatprep.mubr.f32.mxu0 0.0
      %829 = vmatmul.mubr.f32.gmra.mrb[0].mxu0 %v756
      %v830 = vpop.f32.mrb[0].mxu0
      %v831 = vadd.f32 %v749, %v830
      %v832 = vpop.f32.mrb[0].mxu0
      %v833 = vadd.f32 %v749, %v832
      %834 = vdwg.mxu0
      %v835 = vmax.f32 %v825, 0.0
      %v836 = vmax.f32 %v827, 0.0
      %v837 = vmax.f32 %v831, 0.0
      %v838 = vmax.f32 %v833, 0.0
      %841 = vrot.lane.b32.xlu0 %v836, 17
      %v842 = vpop.permute.xlu0 %841
      %843 = vrot.lane.b32.xlu0 %v838, 17
      %v844 = vpop.permute.xlu0 %843
      %849 = vrot.lane.b32.xlu0 %v835, 17
      %v850 = vpop.permute.xlu0 %849
      %851 = vrot.lane.b32.xlu0 %v837, 17
      %v852 = vpop.permute.xlu0 %851
      %v853 = vsel %vm370, %v850, %v842
      %v854 = vsel %vm370, %v852, %v844
      %v859 = vsel %vm370, %v842, %v850
      %v860 = vsel %vm370, %v844, %v852
      %v861 = vmul.f32 %v859, %v378
      %v862 = vmul.f32 %v853, %v382
      %v863 = vmul.f32 %v860, %v378
      %v864 = vmul.f32 %v854, %v382
      %865 = vrot.lane.b32.xlu0 %v836, 16
      %v866 = vpop.permute.xlu0 %865
      %867 = vrot.lane.b32.xlu0 %v838, 16
      %v868 = vpop.permute.xlu0 %867
      %871 = vrot.lane.b32.xlu0 %v835, 16
      %v872 = vpop.permute.xlu0 %871
      %873 = vrot.lane.b32.xlu0 %v837, 16
      %v874 = vpop.permute.xlu0 %873
      %v875 = vsel %vm390, %v872, %v866
      %v876 = vsel %vm390, %v874, %v868
      %v881 = vsel %vm390, %v866, %v872
      %v882 = vsel %vm390, %v868, %v874
      %v883 = vmul.f32 %v881, %v398
      %v884 = vmul.f32 %v875, %v402
      %v885 = vmul.f32 %v882, %v398
      %v886 = vmul.f32 %v876, %v402
      %887 = vrot.lane.b32.xlu0 %v836, 15
      %v888 = vpop.permute.xlu0 %887
      %889 = vrot.lane.b32.xlu0 %v838, 15
      %v890 = vpop.permute.xlu0 %889
      %893 = vrot.lane.b32.xlu0 %v835, 15
      %v894 = vpop.permute.xlu0 %893
      %895 = vrot.lane.b32.xlu0 %v837, 15
      %v896 = vpop.permute.xlu0 %895
      %v897 = vsel %vm410, %v894, %v888
      %v898 = vsel %vm410, %v896, %v890
      %v903 = vsel %vm410, %v888, %v894
      %v904 = vsel %vm410, %v890, %v896
      %v905 = vmul.f32 %v903, %v418
      %v906 = vmul.f32 %v897, %v422
      %v907 = vmul.f32 %v904, %v418
      %v908 = vmul.f32 %v898, %v422
      %909 = vrot.lane.b32.xlu0 %v836, 1
      %v910 = vpop.permute.xlu0 %909
      %911 = vrot.lane.b32.xlu0 %v838, 1
      %v912 = vpop.permute.xlu0 %911
      %915 = vrot.lane.b32.xlu0 %v835, 1
      %v916 = vpop.permute.xlu0 %915
      %917 = vrot.lane.b32.xlu0 %v837, 1
      %v918 = vpop.permute.xlu0 %917
      %v919 = vsel %vm430, %v916, %v910
      %v920 = vsel %vm430, %v918, %v912
      %v925 = vsel %vm430, %v910, %v916
      %v926 = vsel %vm430, %v912, %v918
      %v927 = vmul.f32 %v925, %v438
      %v928 = vmul.f32 %v919, %v442
      %v929 = vmul.f32 %v926, %v438
      %v930 = vmul.f32 %v920, %v442
      %931 = vrot.lane.b32.xlu0 %v835, 127
      %v932 = vpop.permute.xlu0 %931
      %933 = vrot.lane.b32.xlu0 %v836, 127
      %v934 = vpop.permute.xlu0 %933
      %935 = vrot.lane.b32.xlu0 %v837, 127
      %v936 = vpop.permute.xlu0 %935
      %937 = vrot.lane.b32.xlu0 %v838, 127
      %v938 = vpop.permute.xlu0 %937
      %v939 = vsel %vm449, %v932, %v934
      %v940 = vsel %vm449, %v936, %v938
      %v947 = vsel %vm449, %v934, %v932
      %v948 = vsel %vm449, %v938, %v936
      %v949 = vmul.f32 %v939, %v458
      %v950 = vmul.f32 %v947, %v462
      %v951 = vmul.f32 %v940, %v458
      %v952 = vmul.f32 %v948, %v462
      %953 = vrot.lane.b32.xlu0 %v835, 113
      %v954 = vpop.permute.xlu0 %953
      %955 = vrot.lane.b32.xlu0 %v836, 113
      %v956 = vpop.permute.xlu0 %955
      %957 = vrot.lane.b32.xlu0 %v837, 113
      %v958 = vpop.permute.xlu0 %957
      %959 = vrot.lane.b32.xlu0 %v838, 113
      %v960 = vpop.permute.xlu0 %959
      %v961 = vsel %vm469, %v954, %v956
      %v962 = vsel %vm469, %v958, %v960
      %v969 = vsel %vm469, %v956, %v954
      %v970 = vsel %vm469, %v960, %v958
      %v971 = vmul.f32 %v961, %v478
      %v972 = vmul.f32 %v969, %v482
      %v973 = vmul.f32 %v962, %v478
      %v974 = vmul.f32 %v970, %v482
      %975 = vrot.lane.b32.xlu0 %v835, 112
      %v976 = vpop.permute.xlu0 %975
      %977 = vrot.lane.b32.xlu0 %v836, 112
      %v978 = vpop.permute.xlu0 %977
      %979 = vrot.lane.b32.xlu0 %v837, 112
      %v980 = vpop.permute.xlu0 %979
      %981 = vrot.lane.b32.xlu0 %v838, 112
      %v982 = vpop.permute.xlu0 %981
      %v983 = vsel %vm489, %v976, %v978
      %v984 = vsel %vm489, %v980, %v982
      %v991 = vsel %vm489, %v978, %v976
      %v992 = vsel %vm489, %v982, %v980
      %v993 = vmul.f32 %v983, %v498
      %v994 = vmul.f32 %v991, %v502
      %v995 = vmul.f32 %v984, %v498
      %v996 = vmul.f32 %v992, %v502
      %997 = vrot.lane.b32.xlu0 %v835, 111
      %v998 = vpop.permute.xlu0 %997
      %999 = vrot.lane.b32.xlu0 %v836, 111
      %v1000 = vpop.permute.xlu0 %999
      %1001 = vrot.lane.b32.xlu0 %v837, 111
      %v1002 = vpop.permute.xlu0 %1001
      %1003 = vrot.lane.b32.xlu0 %v838, 111
      %v1004 = vpop.permute.xlu0 %1003
      %v1005 = vsel %vm509, %v998, %v1000
      %v1006 = vsel %vm509, %v1002, %v1004
      %v1013 = vsel %vm509, %v1000, %v998
      %v1014 = vsel %vm509, %v1004, %v1002
      %v1015 = vmul.f32 %v1005, %v518
      %v1016 = vmul.f32 %v1013, %v522
      %v1017 = vmul.f32 %v1006, %v518
      %v1018 = vmul.f32 %v1014, %v522
      %v1019 = vld [vmem:[%s6] sm:$0xff]
      %v1020 = vld [vmem:[%s6 + $0x8] sm:$0xff]
      %v1021 = vld [vmem:[%s7] sm:$0xff]
      %1023 = vset.pattern.permute.xlu0 0
      %1024 = vperm.xlu0 %1023, %v1021
      %v1025 = vpop.permute.xlu0 %1024
      %v1028 = vsel %vm390, %v1020, 0
      %1030 = vmatprep.subr.mxu0 %v862
      %1031 = vmatpush1.msra.mxu0 %v861
      %1032 = vmatprep.subr.mxu0 %v864
      %1033 = vmatpush1.msra.mxu0 %v863
      %1034 = vmatprep.subr.mxu0 %v884
      %1035 = vmatpush1.msra.mxu0 %v883
      %1036 = vmatprep.subr.mxu0 %v886
      %1037 = vmatpush1.msra.mxu0 %v885
      %1038 = vmatprep.subr.mxu0 %v906
      %1039 = vmatpush1.msra.mxu0 %v905
      %1040 = vmatprep.subr.mxu0 %v908
      %1041 = vmatpush1.msra.mxu0 %v907
      %1042 = vmatprep.subr.mxu0 %v928
      %1043 = vmatpush1.msra.mxu0 %v927
      %1044 = vmatprep.subr.mxu0 %v930
      %1045 = vmatpush1.msra.mxu0 %v929
      %1046 = vmatprep.subr.mxu0 %v836
      %1047 = vmatpush1.msra.mxu0 %v835
      %1048 = vmatprep.subr.mxu0 %v838
      %1049 = vmatpush1.msra.mxu0 %v837
      %1050 = vmatprep.subr.mxu0 %v950
      %1051 = vmatpush1.msra.mxu0 %v949
      %1052 = vmatprep.subr.mxu0 %v952
      %1053 = vmatpush1.msra.mxu0 %v951
      %1054 = vmatprep.subr.mxu0 %v972
      %1055 = vmatpush1.msra.mxu0 %v971
      %1056 = vmatprep.subr.mxu0 %v974
      %1057 = vmatpush1.msra.mxu0 %v973
      %1058 = vmatprep.subr.mxu0 %v994
      %1059 = vmatpush1.msra.mxu0 %v993
      %1060 = vmatprep.subr.mxu0 %v996
      %1061 = vmatpush1.msra.mxu0 %v995
      %1062 = vmatprep.subr.mxu0 %v1016
      %1063 = vmatpush1.msra.mxu0 %v1015
      %1064 = vmatprep.subr.mxu0 %v1018
      %1065 = vmatpush1.msra.mxu0 %v1017
      %1066 = vmatprep.subr.mxu0 0.0
      %1067 = vmatpush1.msra.mxu0 0.0
      %1068 = vmatprep.subr.mxu0 0.0
      %1069 = vmatpush1.msra.mxu0 0.0
      %1070 = vmatprep.subr.mxu0 0.0
      %1071 = vmatpush1.msra.mxu0 0.0
      %1072 = vmatprep.subr.mxu0 0.0
      %1073 = vmatpush1.msra.mxu0 0.0
      %1074 = vmatprep.subr.mxu0 0.0
      %1075 = vmatpush1.msra.mxu0 0.0
      %1076 = vmatprep.subr.mxu0 0.0
      %1077 = vmatpush1.msra.mxu0 0.0
      %1078 = vmatprep.subr.mxu0 0.0
      %1079 = vmatpush1.msra.mxu0 0.0
      %1080 = vmatprep.subr.mxu0 0.0
      %1081 = vmatpush1.msra.mxu0 0.0
      %1082 = vmatprep.subr.mxu0 0.0
      %1083 = vmatpush1.msra.mxu0 0.0
      %1084 = vmatprep.subr.mxu0 0.0
      %1085 = vmatpush1.msra.mxu0 0.0
      %1086 = vmatprep.subr.mxu0 0.0
      %1087 = vmatpush1.msra.mxu0 0.0
      %1088 = vmatprep.subr.mxu0 0.0
      %1089 = vmatpush1.msra.mxu0 0.0
      %1090 = vmatprep.subr.mxu0 0.0
      %1091 = vmatpush1.msra.mxu0 0.0
      %1092 = vmatprep.subr.mxu0 0.0
      %1093 = vmatpush1.msra.mxu0 0.0
      %1094 = vmatprep.mubr.f32.mxu0 %v1028
      %1095 = vmatmul.mubr.f32.gmra.mrb[0].mxu0 %v1019
      %v1096 = vpop.f32.mrb[0].mxu0
      %v1097 = vadd.f32 %v1025, %v1096
      %v1098 = vpop.f32.mrb[0].mxu0
      %v1099 = vadd.f32 %v1025, %v1098
      %1100 = vdwg.mxu0
      %1102 = vrot.lane.b32.xlu0 %v1099, 17
      %v1103 = vpop.permute.xlu0 %1102
      %1106 = vrot.lane.b32.xlu0 %v1097, 17
      %v1107 = vpop.permute.xlu0 %1106
      %v1108 = vsel %vm370, %v1107, %v1103
      %v1111 = vsel %vm370, %v1103, %v1107
      %v1112 = vmul.f32 %v1111, %v378
      %v1113 = vmul.f32 %v1108, %v382
      %1114 = vrot.lane.b32.xlu0 %v1099, 16
      %v1115 = vpop.permute.xlu0 %1114
      %1117 = vrot.lane.b32.xlu0 %v1097, 16
      %v1118 = vpop.permute.xlu0 %1117
      %v1119 = vsel %vm390, %v1118, %v1115
      %v1122 = vsel %vm390, %v1115, %v1118
      %v1123 = vmul.f32 %v1122, %v398
      %v1124 = vmul.f32 %v1119, %v402
      %1125 = vrot.lane.b32.xlu0 %v1099, 15
      %v1126 = vpop.permute.xlu0 %1125
      %1128 = vrot.lane.b32.xlu0 %v1097, 15
      %v1129 = vpop.permute.xlu0 %1128
      %v1130 = vsel %vm410, %v1129, %v1126
      %v1133 = vsel %vm410, %v1126, %v1129
      %v1134 = vmul.f32 %v1133, %v418
      %v1135 = vmul.f32 %v1130, %v422
      %1136 = vrot.lane.b32.xlu0 %v1099, 1
      %v1137 = vpop.permute.xlu0 %1136
      %1139 = vrot.lane.b32.xlu0 %v1097, 1
      %v1140 = vpop.permute.xlu0 %1139
      %v1141 = vsel %vm430, %v1140, %v1137
      %v1144 = vsel %vm430, %v1137, %v1140
      %v1145 = vmul.f32 %v1144, %v438
      %v1146 = vmul.f32 %v1141, %v442
      %1147 = vrot.lane.b32.xlu0 %v1097, 127
      %v1148 = vpop.permute.xlu0 %1147
      %1149 = vrot.lane.b32.xlu0 %v1099, 127
      %v1150 = vpop.permute.xlu0 %1149
      %v1151 = vsel %vm449, %v1148, %v1150
      %v1155 = vsel %vm449, %v1150, %v1148
      %v1156 = vmul.f32 %v1151, %v458
      %v1157 = vmul.f32 %v1155, %v462
      %1158 = vrot.lane.b32.xlu0 %v1097, 113
      %v1159 = vpop.permute.xlu0 %1158
      %1160 = vrot.lane.b32.xlu0 %v1099, 113
      %v1161 = vpop.permute.xlu0 %1160
      %v1162 = vsel %vm469, %v1159, %v1161
      %v1166 = vsel %vm469, %v1161, %v1159
      %v1167 = vmul.f32 %v1162, %v478
      %v1168 = vmul.f32 %v1166, %v482
      %1169 = vrot.lane.b32.xlu0 %v1097, 112
      %v1170 = vpop.permute.xlu0 %1169
      %1171 = vrot.lane.b32.xlu0 %v1099, 112
      %v1172 = vpop.permute.xlu0 %1171
      %v1173 = vsel %vm489, %v1170, %v1172
      %v1177 = vsel %vm489, %v1172, %v1170
      %v1178 = vmul.f32 %v1173, %v498
      %v1179 = vmul.f32 %v1177, %v502
      %1180 = vrot.lane.b32.xlu0 %v1097, 111
      %v1181 = vpop.permute.xlu0 %1180
      %1182 = vrot.lane.b32.xlu0 %v1099, 111
      %v1183 = vpop.permute.xlu0 %1182
      %v1184 = vsel %vm509, %v1181, %v1183
      %v1188 = vsel %vm509, %v1183, %v1181
      %v1189 = vmul.f32 %v1184, %v518
      %v1190 = vmul.f32 %v1188, %v522
      %v1191 = vld [vmem:[%s8] sm:$0xff]
      %v1192 = vld [vmem:[%s9] sm:$0xff]
      %1194 = vset.pattern.permute.xlu0 0
      %1195 = vperm.xlu0 %1194, %v1192
      %v1196 = vpop.permute.xlu0 %1195
      %v1199 = vsel %vm751, %v1191, 0
      %1201 = vmatprep.subr.mxu0 %v1113
      %1202 = vmatpush1.msra.mxu0 %v1112
      %1203 = vmatprep.subr.mxu0 %v1124
      %1204 = vmatpush1.msra.mxu0 %v1123
      %1205 = vmatprep.subr.mxu0 %v1135
      %1206 = vmatpush1.msra.mxu0 %v1134
      %1207 = vmatprep.subr.mxu0 %v1146
      %1208 = vmatpush1.msra.mxu0 %v1145
      %1209 = vmatprep.subr.mxu0 %v1099
      %1210 = vmatpush1.msra.mxu0 %v1097
      %1211 = vmatprep.subr.mxu0 %v1157
      %1212 = vmatpush1.msra.mxu0 %v1156
      %1213 = vmatprep.subr.mxu0 %v1168
      %1214 = vmatpush1.msra.mxu0 %v1167
      %1215 = vmatprep.subr.mxu0 %v1179
      %1216 = vmatpush1.msra.mxu0 %v1178
      %1217 = vmatprep.subr.mxu0 %v1190
      %1218 = vmatpush1.msra.mxu0 %v1189
      %1219 = vmatprep.subr.mxu0 0.0
      %1220 = vmatpush1.msra.mxu0 0.0
      %1221 = vmatprep.subr.mxu0 0.0
      %1222 = vmatpush1.msra.mxu0 0.0
      %1223 = vmatprep.subr.mxu0 0.0
      %1224 = vmatpush1.msra.mxu0 0.0
      %1225 = vmatprep.subr.mxu0 0.0
      %1226 = vmatpush1.msra.mxu0 0.0
      %1227 = vmatprep.subr.mxu0 0.0
      %1228 = vmatpush1.msra.mxu0 0.0
      %1229 = vmatprep.subr.mxu0 0.0
      %1230 = vmatpush1.msra.mxu0 0.0
      %1231 = vmatprep.subr.mxu0 0.0
      %1232 = vmatpush1.msra.mxu0 0.0
      %1233 = vmatprep.subr.mxu0 0.0
      %1234 = vmatpush1.msra.mxu0 0.0
      %1235 = vmatprep.subr.mxu0 0.0
      %1236 = vmatpush1.msra.mxu0 0.0
      %1237 = vmatprep.subr.mxu0 0.0
      %1238 = vmatpush1.msra.mxu0 0.0
      %1239 = vmatprep.subr.mxu0 0.0
      %1240 = vmatpush1.msra.mxu0 0.0
      %1241 = vmatprep.subr.mxu0 0.0
      %1242 = vmatpush1.msra.mxu0 0.0
      %1243 = vmatprep.subr.mxu0 0.0
      %1244 = vmatpush1.msra.mxu0 0.0
      %1245 = vmatprep.subr.mxu0 0.0
      %1246 = vmatpush1.msra.mxu0 0.0
      %1247 = vmatprep.subr.mxu0 0.0
      %1248 = vmatpush1.msra.mxu0 0.0
      %1249 = vmatprep.subr.mxu0 0.0
      %1250 = vmatpush1.msra.mxu0 0.0
      %1251 = vmatprep.subr.mxu0 0.0
      %1252 = vmatpush1.msra.mxu0 0.0
      %1253 = vmatprep.subr.mxu0 0.0
      %1254 = vmatpush1.msra.mxu0 0.0
      %1255 = vmatprep.subr.mxu0 0.0
      %1256 = vmatpush1.msra.mxu0 0.0
      %1257 = vmatprep.subr.mxu0 0.0
      %1258 = vmatpush1.msra.mxu0 0.0
      %1259 = vmatprep.subr.mxu0 0.0
      %1260 = vmatpush1.msra.mxu0 0.0
      %1261 = vmatprep.subr.mxu0 0.0
      %1262 = vmatpush1.msra.mxu0 0.0
      %1263 = vmatprep.subr.mxu0 0.0
      %1264 = vmatpush1.msra.mxu0 0.0
      %1265 = vmatprep.mubr.f32.mxu0 0.0
      %1266 = vmatmul.mubr.f32.gmra.mrb[0].mxu0 %v1199
      %v1267 = vpop.f32.mrb[0].mxu0
      %v1268 = vadd.f32 %v1196, %v1267
      %v1269 = vpop.f32.mrb[0].mxu0
      %v1270 = vadd.f32 %v1196, %v1269
      %1271 = vdwg.mxu0
      %v1272 = vxor.u32 %v1268, 2147483648
      %v1273 = vxor.u32 %v1270, 2147483648
      %v1274 = vmul.f32 %v1272, 1.442695
      %v1275 = vpow.pop %v1274
      %v1276 = vmul.f32 %v1273, 1.442695
      %v1277 = vpow.pop %v1276
      %v1278 = vadd.f32 %v1275, 1.0
      %v1279 = vadd.f32 %v1277, 1.0
      %v1280 = vrcp.pop %v1278
      %v1281 = vmul.f32 1.0, %v1280
      %v1282 = vrcp.pop %v1279
      %v1283 = vmul.f32 1.0, %v1282
      %v1286 = vcombine.low %v1281, %v1283
      %v1288 = vunpack.c.l.s4 1966171168
      %v1289 = vunpack.c.0.s8 %v1288
      %v1290 = vlaneseq
      %v1291 = vshrl.u32 %v1290, 7
      %v1292 = vsub.s32 %v1289, %v1291
      %v1293 = vrot.slane %v1286, %v1292
      %v1295 = vunpack.c.l.s4 1966171168
      %v1296 = vunpack.c.0.s8 %v1295
      %v1297 = vlaneseq
      %v1298 = vshrl.u32 %v1297, 7
      %v1299 = vsub.s32 %v1296, %v1298
      %v1300 = vrot.slane %v1293, %v1299
      %v1302 = vlaneseq
      %vm1303 = vcmp.ge.s32.totalorder %v1302, 0
      %vm1304 = vcmp.lt.s32.totalorder %v1302, 256
      %vm1305 = vmand %vm1303, %vm1304
      %1306 = vst.msk [vmem:[%s357] sm:$0x3] %vm1305, %v1300
      %p1307 = scmp.lt.s32.totalorder %s21, 1
      %s1308 = scalar_select %p1307, %s21, 1
      %s1309 = smul.addr %s1308, 2
      %s1310 = scalar_lea.vmem %s10, %s1309
      // Predicated region
      $region61: #{simple_seg_net_forward.1} parent=59 // pred_check
        %p1311 = pneg %p254
      $region62: #{simple_seg_net_forward.1} parent=59 // pred_check_branch
        %1313 = sbr.rel (%p1311) target = $region64
      $region63: #{simple_seg_net_forward.1} parent=59 // pred_region
        _
      $region64: #{simple_seg_net_forward.1} parent=59 // pred_fallthru
        _
    $region60: #{simple_seg_net_forward.1} parent=5 // pred_fallthru
      _
    %p1314 = scmp.le.s32.totalorder 2, %s16
    // Predicated region
    $region65: #{simple_seg_net_forward.1} parent=5 // pred_check
      %p1315 = pneg %p1314
    $region66: #{simple_seg_net_forward.1} parent=5 // pred_check_branch
      %1317 = sbr.rel (%p1315) target = $region68
    $region67: #{simple_seg_net_forward.1} parent=5 // pred_region
      %s1318 = ssub.s32 %s16, 2
      // Predicated region
      $region69: #{simple_seg_net_forward.1} parent=67 // pred_check
        %p1319 = pneg %p260
      $region70: #{simple_seg_net_forward.1} parent=67 // pred_check_branch
        %1321 = sbr.rel (%p1319) target = $region72
      $region71: #{simple_seg_net_forward.1} parent=67 // pred_region
        %p1322 = scmp.lt.s32.totalorder %s22, 1
        %s1323 = scalar_select %p1322, %s22, 1
        %s1324 = smul.addr %s1323, 2
        %s1325 = scalar_lea.vmem %s10, %s1324
      $region72: #{simple_seg_net_forward.1} parent=67 // pred_fallthru
        _
    $region68: #{simple_seg_net_forward.1} parent=5 // pred_fallthru
      _
  $region6: #{simple_seg_net_forward.1} parent=0 // loop_footer
    %s20 = sadd.s32 1, %s16
  $region7: #{simple_seg_net_forward.1} parent=0 // loop_footer_branch
    %15 = sbr.rel target = $region3
  $region8: #{simple_seg_net_forward.1} parent=0 // loop_exit
    _

</llo_original>
